<compile_context>
chip_gen: v7x
topology: tpu7x:2x2x1
jax: 0.10.0
libtpu: 0.0.40
codegen_flags: <defaults>
</compile_context>

<pallas_src>
import functools

import numpy as np

import jax
import jax.numpy as jnp
from jax.experimental import pallas as pl
from jax.experimental.pallas import tpu as pltpu

LANE = 128


def _localizator_kernel(x_ref, cmask_ref, w1_ref, b1_ref, w2_ref, b2_ref,
                        out_ref, xg_ref, patches_ref, *, kh, kw, H, W, guard):
    """Fused conv3x3(pad=1) + bias + ReLU + global-avg-pool + linear head.

    x_ref      : (bB, C, H, W)   raw NCHW block (no wrapper transpose / pad)
    cmask_ref  : (2, P)          row0: 0.0 at col 0, row1: 0.0 at col W-1
    w1_ref     : (C1, K)         K = kh*kw*C, columns ordered (dy, dx, c)
    b1_ref     : (C1, 1)
    w2_ref     : (C1, LANE)      fc weight zero-padded to 128 output lanes
    b2_ref     : (1, LANE)
    out_ref    : (1, bB, LANE)
    xg_ref     : (C, P + 2*guard)  VMEM zero-guarded lane-flat input
    patches_ref: (K, P)            VMEM im2col slab (built in-kernel)
    """
    bB, C, _, _ = x_ref.shape
    P = H * W
    ph, pw = (kh - 1) // 2, (kw - 1) // 2
    inv_p = 1.0 / P

    # Zero the guard bands once per grid step; the interior is fully
    # overwritten for every batch element below.
    xg_ref[...] = jnp.zeros_like(xg_ref)

    mask_l = cmask_ref[0:1, :]   # kills dest column 0    (taps with dx-ph < 0)
    mask_r = cmask_ref[1:2, :]   # kills dest column W-1  (taps with dx-ph > 0)

    for b in range(bB):          # static unroll; bB is small
        # ---- fused NCHW -> lane-flat (C, P) copy (replaces transpose+pad) --
        for y in range(H):
            xg_ref[:, guard + y * W: guard + (y + 1) * W] = x_ref[b, :, y, :]

        # ---- fused im2col: kh*kw shifted, column-masked taps -> (K, P) ----
        for t in range(kh * kw):
            dy, dx = divmod(t, kw)
            s = (dy - ph) * W + (dx - pw)            # flat shift, |s| <= guard
            tap = xg_ref[:, guard + s: guard + s + P]          # (C, P)
            if dx - pw < 0:
                tap = tap * mask_l
            elif dx - pw > 0:
                tap = tap * mask_r
            patches_ref[t * C:(t + 1) * C, :] = tap

        # ---- conv as ONE MXU matmul, lane-dense (C1, P) orientation -------
        h = jnp.dot(w1_ref[...], patches_ref[...],
                    preferred_element_type=jnp.float32)        # (C1, P)
        h = jnp.maximum(h + b1_ref[...], 0.0)                  # bias + ReLU

        # ---- mean-pool folded through the head:
        #      mean_p(h) @ W2 == (1/P) * sum_p (h^T @ W2)[p, :]  ------------
        g = jnp.dot(jnp.transpose(h), w2_ref[...],
                    preferred_element_type=jnp.float32)        # (P, LANE)
        row = jnp.sum(g, axis=0, keepdims=True) * inv_p + b2_ref[...]
        out_ref[0, b:b + 1, :] = row                           # lane-dense row


@functools.partial(jax.jit, static_argnames=("kh", "kw"))
def localization_trainer_forward(x_nchw, w_conv, b_conv, w_fc, b_fc, kh=3, kw=3):
    """Forward pass of LocalizationTrainer_v1 (== localizator(x)).

    x_nchw : (B, C, H, W)       float32 (PyTorch NCHW convention)
    w_conv : (C1, kh*kw*C)      float32, cols ordered (dy, dx, c)  [see header]
    b_conv : (C1, 1)            float32
    w_fc   : (C1, C_out)        float32
    b_fc   : (1, C_out)         float32
    returns: (B, C_out)         float32
    """
    B, C, H, W = x_nchw.shape
    C1, K = w_conv.shape
    C_out = w_fc.shape[1]
    assert K == kh * kw * C
    P = H * W

    # Batch tiling: tile = ceil(B/2) (capped at 16) -> always >= 2 parallel
    # grid steps for v7x megacore, amortized per-step overhead for larger B.
    bB = 1 if B <= 1 else min(16, pl.cdiv(B, 2))
    G = pl.cdiv(B, bB)
    Bp = G * bB
    x_in = x_nchw if Bp == B else jnp.pad(
        x_nchw, ((0, Bp - B), (0, 0), (0, 0), (0, 0)))

    # Lane-padded head params -> single unmasked 128-wide output row store.
    w2p = jnp.pad(w_fc, ((0, 0), (0, LANE - C_out)))
    b2p = jnp.pad(b_fc, ((0, 0), (0, LANE - C_out)))

    # Column-boundary masks (trace-time constants; no runtime HLO work).
    col = np.arange(P) % W
    cmask = jnp.asarray(
        np.stack([(col != 0), (col != W - 1)]).astype(np.float32))

    ph, pw = (kh - 1) // 2, (kw - 1) // 2
    guard = ((ph * W + pw + 1 + 127) // 128) * 128   # lane-tile-rounded guard

    flops = Bp * (2 * P * K * C1 + 2 * P * C1 * LANE + 4 * P * C1)
    bytes_accessed = 4 * (Bp * C * P + K * C1 + C1 + C1 * LANE + LANE
                          + Bp * LANE + 2 * P)

    out = pl.pallas_call(
        functools.partial(_localizator_kernel, kh=kh, kw=kw, H=H, W=W,
                          guard=guard),
        out_shape=jax.ShapeDtypeStruct((G, bB, LANE), jnp.float32),
        grid=(G,),
        in_specs=[
            pl.BlockSpec((bB, C, H, W), lambda i: (i, 0, 0, 0)),  # raw NCHW
            pl.BlockSpec((2, P), lambda i: (0, 0)),               # col masks
            pl.BlockSpec((C1, K), lambda i: (0, 0)),              # conv weight
            pl.BlockSpec((C1, 1), lambda i: (0, 0)),              # conv bias
            pl.BlockSpec((C1, LANE), lambda i: (0, 0)),           # fc weight
            pl.BlockSpec((1, LANE), lambda i: (0, 0)),            # fc bias
        ],
        out_specs=pl.BlockSpec((1, bB, LANE), lambda i: (i, 0, 0)),
        scratch_shapes=[
            pltpu.VMEM((C, P + 2 * guard), jnp.float32),   # guarded flat input
            pltpu.VMEM((K, P), jnp.float32),               # im2col slab
        ],
        compiler_params=pltpu.CompilerParams(
            dimension_semantics=("parallel",)),
        cost_estimate=pl.CostEstimate(
            flops=flops, transcendentals=0, bytes_accessed=bytes_accessed),
    )(x_in, cmask, w_conv, b_conv, w2p, b2p)

    return out.reshape(Bp, LANE)[:B, :C_out]


def init_localizator_params(key, c_in=4, c_mid=8, c_out=3, kh=3, kw=3):
    """Deterministic synthetic parameters (shapes follow the localizator)."""
    k1, k2, k3, k4 = jax.random.split(key, 4)
    k_in = kh * kw * c_in
    w_conv = jax.random.normal(k1, (c_mid, k_in), jnp.float32) * (1.0 / k_in) ** 0.5
    b_conv = jax.random.normal(k2, (c_mid, 1), jnp.float32) * 0.01
    w_fc = jax.random.normal(k3, (c_mid, c_out), jnp.float32) * (1.0 / c_mid) ** 0.5
    b_fc = jax.random.normal(k4, (1, c_out), jnp.float32) * 0.01
    return w_conv, b_conv, w_fc, b_fc


if __name__ == "__main__":
    key = jax.random.PRNGKey(0)
    kx, kp = jax.random.split(key)

    # Small shapes consistent with the module: batch=2, channels=4, spatial=16.
    B, C, H, W = 2, 4, 16, 16
    x = jax.random.normal(kx, (B, C, H, W), jnp.float32)
    w_conv, b_conv, w_fc, b_fc = init_localizator_params(kp, c_in=C)

    out = localization_trainer_forward(x, w_conv, b_conv, w_fc, b_fc)
    out = jax.block_until_ready(out)
    assert out.shape == (B, 3) and out.dtype == jnp.float32

    # Pure-JAX reference of the same localizator (sanity check).
    xh = jnp.transpose(x, (0, 2, 3, 1))
    xp = jnp.pad(xh, ((0, 0), (1, 1), (1, 1), (0, 0)))
    taps = [xp[:, dy:dy + H, dx:dx + W, :] for dy in range(3) for dx in range(3)]
    patches = jnp.stack(taps, axis=3).reshape(B, H * W, 9 * C)
    h = jnp.maximum(jnp.einsum("bpk,ok->bpo", patches, w_conv)
                    + b_conv.reshape(1, 1, -1), 0.0)
    ref = jnp.mean(h, axis=1) @ w_fc + b_fc
    assert jnp.allclose(out, ref, atol=1e-3, rtol=1e-3), (
        float(jnp.max(jnp.abs(out - ref))))

    # TODO(synk): the .train()/optimizer/MSELoss/early-stopping/encoder-loading
    # logic of the trainer is host-side training orchestration and has no
    # Pallas-kernel equivalent.
    print("KERNEL_OK")
</pallas_src>

<mosaic_0001>
module attributes {stable_mosaic.version = 11 : i64} {
  func.func @_localizator_kernel(%arg0: i32, %arg1: memref<1x4x16x16xf32, #tpu.memory_space<vmem>>, %arg2: memref<2x256xf32, #tpu.memory_space<vmem>>, %arg3: memref<8x36xf32, #tpu.memory_space<vmem>>, %arg4: memref<8x1xf32, #tpu.memory_space<vmem>>, %arg5: memref<8x128xf32, #tpu.memory_space<vmem>>, %arg6: memref<1x128xf32, #tpu.memory_space<vmem>>, %arg7: memref<1x1x128xf32, #tpu.memory_space<vmem>>, %arg8: memref<4x512xf32, #tpu.memory_space<vmem>>, %arg9: memref<36x256xf32, #tpu.memory_space<vmem>>) attributes {dimension_semantics = [#tpu.dimension_semantics<parallel>], iteration_bounds = array<i64: 2>, scalar_prefetch = 0 : i64, scratch_operands = 2 : i64, tpu.core_type = #tpu.core_type<tc>, window_params = [{transform_indices = @transform_0, window_bounds = array<i64: 1, 4, 16, 16>}, {pipeline_mode = #tpu.pipeline_mode<synchronous>, transform_indices = @transform_1, window_bounds = array<i64: 2, 256>}, {pipeline_mode = #tpu.pipeline_mode<synchronous>, transform_indices = @transform_2, window_bounds = array<i64: 8, 36>}, {pipeline_mode = #tpu.pipeline_mode<synchronous>, transform_indices = @transform_3, window_bounds = array<i64: 8, 1>}, {pipeline_mode = #tpu.pipeline_mode<synchronous>, transform_indices = @transform_4, window_bounds = array<i64: 8, 128>}, {pipeline_mode = #tpu.pipeline_mode<synchronous>, transform_indices = @transform_5, window_bounds = array<i64: 1, 128>}, {transform_indices = @transform_6, window_bounds = array<i64: 1, 1, 128>}]} {
    %cst = arith.constant 0.000000e+00 : f32
    %0 = vector.broadcast %cst : f32 to vector<4x512xf32>
    %c0 = arith.constant 0 : index
    %c0_0 = arith.constant 0 : index
    %1 = vector.load %arg8[%c0, %c0_0] : memref<4x512xf32, #tpu.memory_space<vmem>>, vector<4x512xf32>
    tpu.vector_store %arg8[%c0, %c0_0], %0 {strides = array<i32>} : memref<4x512xf32, #tpu.memory_space<vmem>>, vector<4x512xf32>,
    %c0_1 = arith.constant 0 : index
    %c0_2 = arith.constant 0 : index
    %2 = vector.load %arg2[%c0_1, %c0_2] : memref<2x256xf32, #tpu.memory_space<vmem>>, vector<1x256xf32>
    %c1 = arith.constant 1 : index
    %c0_3 = arith.constant 0 : index
    %3 = vector.load %arg2[%c1, %c0_3] : memref<2x256xf32, #tpu.memory_space<vmem>>, vector<1x256xf32>
    %c0_4 = arith.constant 0 : index
    %c0_5 = arith.constant 0 : index
    %c0_6 = arith.constant 0 : index
    %c0_7 = arith.constant 0 : index
    %4 = vector.load %arg1[%c0_4, %c0_5, %c0_6, %c0_7] : memref<1x4x16x16xf32, #tpu.memory_space<vmem>>, vector<1x4x1x16xf32>
    %5 = vector.shape_cast %4 : vector<1x4x1x16xf32> to vector<4x16xf32>
    %c0_8 = arith.constant 0 : index
    %c128 = arith.constant 128 : index
    %6 = vector.load %arg8[%c0_8, %c128] : memref<4x512xf32, #tpu.memory_space<vmem>>, vector<4x16xf32>
    tpu.vector_store %arg8[%c0_8, %c128], %5 {strides = array<i32>} : memref<4x512xf32, #tpu.memory_space<vmem>>, vector<4x16xf32>,
    %c0_9 = arith.constant 0 : index
    %c0_10 = arith.constant 0 : index
    %c1_11 = arith.constant 1 : index
    %c0_12 = arith.constant 0 : index
    %7 = vector.load %arg1[%c0_9, %c0_10, %c1_11, %c0_12] : memref<1x4x16x16xf32, #tpu.memory_space<vmem>>, vector<1x4x1x16xf32>
    %8 = vector.shape_cast %7 : vector<1x4x1x16xf32> to vector<4x16xf32>
    %c0_13 = arith.constant 0 : index
    %c144 = arith.constant 144 : index
    %9 = vector.load %arg8[%c0_13, %c144] : memref<4x512xf32, #tpu.memory_space<vmem>>, vector<4x16xf32>
    tpu.vector_store %arg8[%c0_13, %c144], %8 {strides = array<i32>} : memref<4x512xf32, #tpu.memory_space<vmem>>, vector<4x16xf32>,
    %c0_14 = arith.constant 0 : index
    %c0_15 = arith.constant 0 : index
    %c2 = arith.constant 2 : index
    %c0_16 = arith.constant 0 : index
    %10 = vector.load %arg1[%c0_14, %c0_15, %c2, %c0_16] : memref<1x4x16x16xf32, #tpu.memory_space<vmem>>, vector<1x4x1x16xf32>
    %11 = vector.shape_cast %10 : vector<1x4x1x16xf32> to vector<4x16xf32>
    %c0_17 = arith.constant 0 : index
    %c160 = arith.constant 160 : index
    %12 = vector.load %arg8[%c0_17, %c160] : memref<4x512xf32, #tpu.memory_space<vmem>>, vector<4x16xf32>
    tpu.vector_store %arg8[%c0_17, %c160], %11 {strides = array<i32>} : memref<4x512xf32, #tpu.memory_space<vmem>>, vector<4x16xf32>,
    %c0_18 = arith.constant 0 : index
    %c0_19 = arith.constant 0 : index
    %c3 = arith.constant 3 : index
    %c0_20 = arith.constant 0 : index
    %13 = vector.load %arg1[%c0_18, %c0_19, %c3, %c0_20] : memref<1x4x16x16xf32, #tpu.memory_space<vmem>>, vector<1x4x1x16xf32>
    %14 = vector.shape_cast %13 : vector<1x4x1x16xf32> to vector<4x16xf32>
    %c0_21 = arith.constant 0 : index
    %c176 = arith.constant 176 : index
    %15 = vector.load %arg8[%c0_21, %c176] : memref<4x512xf32, #tpu.memory_space<vmem>>, vector<4x16xf32>
    tpu.vector_store %arg8[%c0_21, %c176], %14 {strides = array<i32>} : memref<4x512xf32, #tpu.memory_space<vmem>>, vector<4x16xf32>,
    %c0_22 = arith.constant 0 : index
    %c0_23 = arith.constant 0 : index
    %c4 = arith.constant 4 : index
    %c0_24 = arith.constant 0 : index
    %16 = vector.load %arg1[%c0_22, %c0_23, %c4, %c0_24] : memref<1x4x16x16xf32, #tpu.memory_space<vmem>>, vector<1x4x1x16xf32>
    %17 = vector.shape_cast %16 : vector<1x4x1x16xf32> to vector<4x16xf32>
    %c0_25 = arith.constant 0 : index
    %c192 = arith.constant 192 : index
    %18 = vector.load %arg8[%c0_25, %c192] : memref<4x512xf32, #tpu.memory_space<vmem>>, vector<4x16xf32>
    tpu.vector_store %arg8[%c0_25, %c192], %17 {strides = array<i32>} : memref<4x512xf32, #tpu.memory_space<vmem>>, vector<4x16xf32>,
    %c0_26 = arith.constant 0 : index
    %c0_27 = arith.constant 0 : index
    %c5 = arith.constant 5 : index
    %c0_28 = arith.constant 0 : index
    %19 = vector.load %arg1[%c0_26, %c0_27, %c5, %c0_28] : memref<1x4x16x16xf32, #tpu.memory_space<vmem>>, vector<1x4x1x16xf32>
    %20 = vector.shape_cast %19 : vector<1x4x1x16xf32> to vector<4x16xf32>
    %c0_29 = arith.constant 0 : index
    %c208 = arith.constant 208 : index
    %21 = vector.load %arg8[%c0_29, %c208] : memref<4x512xf32, #tpu.memory_space<vmem>>, vector<4x16xf32>
    tpu.vector_store %arg8[%c0_29, %c208], %20 {strides = array<i32>} : memref<4x512xf32, #tpu.memory_space<vmem>>, vector<4x16xf32>,
    %c0_30 = arith.constant 0 : index
    %c0_31 = arith.constant 0 : index
    %c6 = arith.constant 6 : index
    %c0_32 = arith.constant 0 : index
    %22 = vector.load %arg1[%c0_30, %c0_31, %c6, %c0_32] : memref<1x4x16x16xf32, #tpu.memory_space<vmem>>, vector<1x4x1x16xf32>
    %23 = vector.shape_cast %22 : vector<1x4x1x16xf32> to vector<4x16xf32>
    %c0_33 = arith.constant 0 : index
    %c224 = arith.constant 224 : index
    %24 = vector.load %arg8[%c0_33, %c224] : memref<4x512xf32, #tpu.memory_space<vmem>>, vector<4x16xf32>
    tpu.vector_store %arg8[%c0_33, %c224], %23 {strides = array<i32>} : memref<4x512xf32, #tpu.memory_space<vmem>>, vector<4x16xf32>,
    %c0_34 = arith.constant 0 : index
    %c0_35 = arith.constant 0 : index
    %c7 = arith.constant 7 : index
    %c0_36 = arith.constant 0 : index
    %25 = vector.load %arg1[%c0_34, %c0_35, %c7, %c0_36] : memref<1x4x16x16xf32, #tpu.memory_space<vmem>>, vector<1x4x1x16xf32>
    %26 = vector.shape_cast %25 : vector<1x4x1x16xf32> to vector<4x16xf32>
    %c0_37 = arith.constant 0 : index
    %c240 = arith.constant 240 : index
    %27 = vector.load %arg8[%c0_37, %c240] : memref<4x512xf32, #tpu.memory_space<vmem>>, vector<4x16xf32>
    tpu.vector_store %arg8[%c0_37, %c240], %26 {strides = array<i32>} : memref<4x512xf32, #tpu.memory_space<vmem>>, vector<4x16xf32>,
    %c0_38 = arith.constant 0 : index
    %c0_39 = arith.constant 0 : index
    %c8 = arith.constant 8 : index
    %c0_40 = arith.constant 0 : index
    %28 = vector.load %arg1[%c0_38, %c0_39, %c8, %c0_40] : memref<1x4x16x16xf32, #tpu.memory_space<vmem>>, vector<1x4x1x16xf32>
    %29 = vector.shape_cast %28 : vector<1x4x1x16xf32> to vector<4x16xf32>
    %c0_41 = arith.constant 0 : index
    %c256 = arith.constant 256 : index
    %30 = vector.load %arg8[%c0_41, %c256] : memref<4x512xf32, #tpu.memory_space<vmem>>, vector<4x16xf32>
    tpu.vector_store %arg8[%c0_41, %c256], %29 {strides = array<i32>} : memref<4x512xf32, #tpu.memory_space<vmem>>, vector<4x16xf32>,
    %c0_42 = arith.constant 0 : index
    %c0_43 = arith.constant 0 : index
    %c9 = arith.constant 9 : index
    %c0_44 = arith.constant 0 : index
    %31 = vector.load %arg1[%c0_42, %c0_43, %c9, %c0_44] : memref<1x4x16x16xf32, #tpu.memory_space<vmem>>, vector<1x4x1x16xf32>
    %32 = vector.shape_cast %31 : vector<1x4x1x16xf32> to vector<4x16xf32>
    %c0_45 = arith.constant 0 : index
    %c272 = arith.constant 272 : index
    %33 = vector.load %arg8[%c0_45, %c272] : memref<4x512xf32, #tpu.memory_space<vmem>>, vector<4x16xf32>
    tpu.vector_store %arg8[%c0_45, %c272], %32 {strides = array<i32>} : memref<4x512xf32, #tpu.memory_space<vmem>>, vector<4x16xf32>,
    %c0_46 = arith.constant 0 : index
    %c0_47 = arith.constant 0 : index
    %c10 = arith.constant 10 : index
    %c0_48 = arith.constant 0 : index
    %34 = vector.load %arg1[%c0_46, %c0_47, %c10, %c0_48] : memref<1x4x16x16xf32, #tpu.memory_space<vmem>>, vector<1x4x1x16xf32>
    %35 = vector.shape_cast %34 : vector<1x4x1x16xf32> to vector<4x16xf32>
    %c0_49 = arith.constant 0 : index
    %c288 = arith.constant 288 : index
    %36 = vector.load %arg8[%c0_49, %c288] : memref<4x512xf32, #tpu.memory_space<vmem>>, vector<4x16xf32>
    tpu.vector_store %arg8[%c0_49, %c288], %35 {strides = array<i32>} : memref<4x512xf32, #tpu.memory_space<vmem>>, vector<4x16xf32>,
    %c0_50 = arith.constant 0 : index
    %c0_51 = arith.constant 0 : index
    %c11 = arith.constant 11 : index
    %c0_52 = arith.constant 0 : index
    %37 = vector.load %arg1[%c0_50, %c0_51, %c11, %c0_52] : memref<1x4x16x16xf32, #tpu.memory_space<vmem>>, vector<1x4x1x16xf32>
    %38 = vector.shape_cast %37 : vector<1x4x1x16xf32> to vector<4x16xf32>
    %c0_53 = arith.constant 0 : index
    %c304 = arith.constant 304 : index
    %39 = vector.load %arg8[%c0_53, %c304] : memref<4x512xf32, #tpu.memory_space<vmem>>, vector<4x16xf32>
    tpu.vector_store %arg8[%c0_53, %c304], %38 {strides = array<i32>} : memref<4x512xf32, #tpu.memory_space<vmem>>, vector<4x16xf32>,
    %c0_54 = arith.constant 0 : index
    %c0_55 = arith.constant 0 : index
    %c12 = arith.constant 12 : index
    %c0_56 = arith.constant 0 : index
    %40 = vector.load %arg1[%c0_54, %c0_55, %c12, %c0_56] : memref<1x4x16x16xf32, #tpu.memory_space<vmem>>, vector<1x4x1x16xf32>
    %41 = vector.shape_cast %40 : vector<1x4x1x16xf32> to vector<4x16xf32>
    %c0_57 = arith.constant 0 : index
    %c320 = arith.constant 320 : index
    %42 = vector.load %arg8[%c0_57, %c320] : memref<4x512xf32, #tpu.memory_space<vmem>>, vector<4x16xf32>
    tpu.vector_store %arg8[%c0_57, %c320], %41 {strides = array<i32>} : memref<4x512xf32, #tpu.memory_space<vmem>>, vector<4x16xf32>,
    %c0_58 = arith.constant 0 : index
    %c0_59 = arith.constant 0 : index
    %c13 = arith.constant 13 : index
    %c0_60 = arith.constant 0 : index
    %43 = vector.load %arg1[%c0_58, %c0_59, %c13, %c0_60] : memref<1x4x16x16xf32, #tpu.memory_space<vmem>>, vector<1x4x1x16xf32>
    %44 = vector.shape_cast %43 : vector<1x4x1x16xf32> to vector<4x16xf32>
    %c0_61 = arith.constant 0 : index
    %c336 = arith.constant 336 : index
    %45 = vector.load %arg8[%c0_61, %c336] : memref<4x512xf32, #tpu.memory_space<vmem>>, vector<4x16xf32>
    tpu.vector_store %arg8[%c0_61, %c336], %44 {strides = array<i32>} : memref<4x512xf32, #tpu.memory_space<vmem>>, vector<4x16xf32>,
    %c0_62 = arith.constant 0 : index
    %c0_63 = arith.constant 0 : index
    %c14 = arith.constant 14 : index
    %c0_64 = arith.constant 0 : index
    %46 = vector.load %arg1[%c0_62, %c0_63, %c14, %c0_64] : memref<1x4x16x16xf32, #tpu.memory_space<vmem>>, vector<1x4x1x16xf32>
    %47 = vector.shape_cast %46 : vector<1x4x1x16xf32> to vector<4x16xf32>
    %c0_65 = arith.constant 0 : index
    %c352 = arith.constant 352 : index
    %48 = vector.load %arg8[%c0_65, %c352] : memref<4x512xf32, #tpu.memory_space<vmem>>, vector<4x16xf32>
    tpu.vector_store %arg8[%c0_65, %c352], %47 {strides = array<i32>} : memref<4x512xf32, #tpu.memory_space<vmem>>, vector<4x16xf32>,
    %c0_66 = arith.constant 0 : index
    %c0_67 = arith.constant 0 : index
    %c15 = arith.constant 15 : index
    %c0_68 = arith.constant 0 : index
    %49 = vector.load %arg1[%c0_66, %c0_67, %c15, %c0_68] : memref<1x4x16x16xf32, #tpu.memory_space<vmem>>, vector<1x4x1x16xf32>
    %50 = vector.shape_cast %49 : vector<1x4x1x16xf32> to vector<4x16xf32>
    %c0_69 = arith.constant 0 : index
    %c368 = arith.constant 368 : index
    %51 = vector.load %arg8[%c0_69, %c368] : memref<4x512xf32, #tpu.memory_space<vmem>>, vector<4x16xf32>
    tpu.vector_store %arg8[%c0_69, %c368], %50 {strides = array<i32>} : memref<4x512xf32, #tpu.memory_space<vmem>>, vector<4x16xf32>,
    %c0_70 = arith.constant 0 : index
    %c111 = arith.constant 111 : index
    %52 = vector.load %arg8[%c0_70, %c111] : memref<4x512xf32, #tpu.memory_space<vmem>>, vector<4x256xf32>
    %53 = vector.broadcast %2 : vector<1x256xf32> to vector<4x256xf32>
    %54 = arith.mulf %52, %53 : vector<4x256xf32>
    %c0_71 = arith.constant 0 : index
    %c0_72 = arith.constant 0 : index
    %55 = vector.load %arg9[%c0_71, %c0_72] : memref<36x256xf32, #tpu.memory_space<vmem>>, vector<4x256xf32>
    tpu.vector_store %arg9[%c0_71, %c0_72], %54 {strides = array<i32>} : memref<36x256xf32, #tpu.memory_space<vmem>>, vector<4x256xf32>,
    %c0_73 = arith.constant 0 : index
    %c112 = arith.constant 112 : index
    %56 = vector.load %arg8[%c0_73, %c112] : memref<4x512xf32, #tpu.memory_space<vmem>>, vector<4x256xf32>
    %c4_74 = arith.constant 4 : index
    %c0_75 = arith.constant 0 : index
    %57 = vector.load %arg9[%c4_74, %c0_75] : memref<36x256xf32, #tpu.memory_space<vmem>>, vector<4x256xf32>
    tpu.vector_store %arg9[%c4_74, %c0_75], %56 {strides = array<i32>} : memref<36x256xf32, #tpu.memory_space<vmem>>, vector<4x256xf32>,
    %c0_76 = arith.constant 0 : index
    %c113 = arith.constant 113 : index
    %58 = vector.load %arg8[%c0_76, %c113] : memref<4x512xf32, #tpu.memory_space<vmem>>, vector<4x256xf32>
    %59 = vector.broadcast %3 : vector<1x256xf32> to vector<4x256xf32>
    %60 = arith.mulf %58, %59 : vector<4x256xf32>
    %c8_77 = arith.constant 8 : index
    %c0_78 = arith.constant 0 : index
    %61 = vector.load %arg9[%c8_77, %c0_78] : memref<36x256xf32, #tpu.memory_space<vmem>>, vector<4x256xf32>
    tpu.vector_store %arg9[%c8_77, %c0_78], %60 {strides = array<i32>} : memref<36x256xf32, #tpu.memory_space<vmem>>, vector<4x256xf32>,
    %c0_79 = arith.constant 0 : index
    %c127 = arith.constant 127 : index
    %62 = vector.load %arg8[%c0_79, %c127] : memref<4x512xf32, #tpu.memory_space<vmem>>, vector<4x256xf32>
    %63 = vector.broadcast %2 : vector<1x256xf32> to vector<4x256xf32>
    %64 = arith.mulf %62, %63 : vector<4x256xf32>
    %c12_80 = arith.constant 12 : index
    %c0_81 = arith.constant 0 : index
    %65 = vector.load %arg9[%c12_80, %c0_81] : memref<36x256xf32, #tpu.memory_space<vmem>>, vector<4x256xf32>
    tpu.vector_store %arg9[%c12_80, %c0_81], %64 {strides = array<i32>} : memref<36x256xf32, #tpu.memory_space<vmem>>, vector<4x256xf32>,
    %c0_82 = arith.constant 0 : index
    %c128_83 = arith.constant 128 : index
    %66 = vector.load %arg8[%c0_82, %c128_83] : memref<4x512xf32, #tpu.memory_space<vmem>>, vector<4x256xf32>
    %c16 = arith.constant 16 : index
    %c0_84 = arith.constant 0 : index
    %67 = vector.load %arg9[%c16, %c0_84] : memref<36x256xf32, #tpu.memory_space<vmem>>, vector<4x256xf32>
    tpu.vector_store %arg9[%c16, %c0_84], %66 {strides = array<i32>} : memref<36x256xf32, #tpu.memory_space<vmem>>, vector<4x256xf32>,
    %c0_85 = arith.constant 0 : index
    %c129 = arith.constant 129 : index
    %68 = vector.load %arg8[%c0_85, %c129] : memref<4x512xf32, #tpu.memory_space<vmem>>, vector<4x256xf32>
    %69 = vector.broadcast %3 : vector<1x256xf32> to vector<4x256xf32>
    %70 = arith.mulf %68, %69 : vector<4x256xf32>
    %c20 = arith.constant 20 : index
    %c0_86 = arith.constant 0 : index
    %71 = vector.load %arg9[%c20, %c0_86] : memref<36x256xf32, #tpu.memory_space<vmem>>, vector<4x256xf32>
    tpu.vector_store %arg9[%c20, %c0_86], %70 {strides = array<i32>} : memref<36x256xf32, #tpu.memory_space<vmem>>, vector<4x256xf32>,
    %c0_87 = arith.constant 0 : index
    %c143 = arith.constant 143 : index
    %72 = vector.load %arg8[%c0_87, %c143] : memref<4x512xf32, #tpu.memory_space<vmem>>, vector<4x256xf32>
    %73 = vector.broadcast %2 : vector<1x256xf32> to vector<4x256xf32>
    %74 = arith.mulf %72, %73 : vector<4x256xf32>
    %c24 = arith.constant 24 : index
    %c0_88 = arith.constant 0 : index
    %75 = vector.load %arg9[%c24, %c0_88] : memref<36x256xf32, #tpu.memory_space<vmem>>, vector<4x256xf32>
    tpu.vector_store %arg9[%c24, %c0_88], %74 {strides = array<i32>} : memref<36x256xf32, #tpu.memory_space<vmem>>, vector<4x256xf32>,
    %c0_89 = arith.constant 0 : index
    %c144_90 = arith.constant 144 : index
    %76 = vector.load %arg8[%c0_89, %c144_90] : memref<4x512xf32, #tpu.memory_space<vmem>>, vector<4x256xf32>
    %c28 = arith.constant 28 : index
    %c0_91 = arith.constant 0 : index
    %77 = vector.load %arg9[%c28, %c0_91] : memref<36x256xf32, #tpu.memory_space<vmem>>, vector<4x256xf32>
    tpu.vector_store %arg9[%c28, %c0_91], %76 {strides = array<i32>} : memref<36x256xf32, #tpu.memory_space<vmem>>, vector<4x256xf32>,
    %c0_92 = arith.constant 0 : index
    %c145 = arith.constant 145 : index
    %78 = vector.load %arg8[%c0_92, %c145] : memref<4x512xf32, #tpu.memory_space<vmem>>, vector<4x256xf32>
    %79 = vector.broadcast %3 : vector<1x256xf32> to vector<4x256xf32>
    %80 = arith.mulf %78, %79 : vector<4x256xf32>
    %c32 = arith.constant 32 : index
    %c0_93 = arith.constant 0 : index
    %81 = vector.load %arg9[%c32, %c0_93] : memref<36x256xf32, #tpu.memory_space<vmem>>, vector<4x256xf32>
    tpu.vector_store %arg9[%c32, %c0_93], %80 {strides = array<i32>} : memref<36x256xf32, #tpu.memory_space<vmem>>, vector<4x256xf32>,
    %c0_94 = arith.constant 0 : index
    %c0_95 = arith.constant 0 : index
    %82 = vector.load %arg3[%c0_94, %c0_95] : memref<8x36xf32, #tpu.memory_space<vmem>>, vector<8x36xf32>
    %c0_96 = arith.constant 0 : index
    %c0_97 = arith.constant 0 : index
    %83 = vector.load %arg9[%c0_96, %c0_97] : memref<36x256xf32, #tpu.memory_space<vmem>>, vector<36x256xf32>
    %cst_98 = arith.constant dense<0.000000e+00> : vector<8x256xf32>
    %84 = tpu.matmul %82, %83, %cst_98 {dimension_numbers = #tpu.dot_dimension_numbers<[1], [0], [0], [1], [0, 0, 1, 1], [], []>} : vector<8x36xf32>, vector<36x256xf32>, vector<8x256xf32> -> vector<8x256xf32>
    %c0_99 = arith.constant 0 : index
    %c0_100 = arith.constant 0 : index
    %85 = vector.load %arg4[%c0_99, %c0_100] : memref<8x1xf32, #tpu.memory_space<vmem>>, vector<8x1xf32>
    %86 = vector.broadcast %85 : vector<8x1xf32> to vector<8x256xf32>
    %87 = arith.addf %84, %86 : vector<8x256xf32>
    %cst_101 = arith.constant 0.000000e+00 : f32
    %88 = vector.broadcast %cst_101 : f32 to vector<8x256xf32>
    %89 = arith.maximumf %87, %88 : vector<8x256xf32>
    %90 = tpu.transpose %89, [1, 0] : vector<8x256xf32> -> vector<256x8xf32>
    %c0_102 = arith.constant 0 : index
    %c0_103 = arith.constant 0 : index
    %91 = vector.load %arg5[%c0_102, %c0_103] : memref<8x128xf32, #tpu.memory_space<vmem>>, vector<8x128xf32>
    %cst_104 = arith.constant dense<0.000000e+00> : vector<256x128xf32>
    %92 = tpu.matmul %90, %91, %cst_104 {dimension_numbers = #tpu.dot_dimension_numbers<[1], [0], [0], [1], [0, 0, 1, 1], [], []>} : vector<256x8xf32>, vector<8x128xf32>, vector<256x128xf32> -> vector<256x128xf32>
    %cst_105 = arith.constant dense<0.000000e+00> : vector<128xf32>
    %93 = vector.multi_reduction <add>, %92, %cst_105 [0] : vector<256x128xf32> to vector<128xf32>
    %94 = vector.shape_cast %93 : vector<128xf32> to vector<1x128xf32>
    %cst_106 = arith.constant 3.906250e-03 : f32
    %95 = vector.broadcast %cst_106 : f32 to vector<1x128xf32>
    %96 = arith.mulf %94, %95 : vector<1x128xf32>
    %c0_107 = arith.constant 0 : index
    %c0_108 = arith.constant 0 : index
    %97 = vector.load %arg6[%c0_107, %c0_108] : memref<1x128xf32, #tpu.memory_space<vmem>>, vector<1x128xf32>
    %98 = arith.addf %96, %97 : vector<1x128xf32>
    %c0_109 = arith.constant 0 : index
    %c0_110 = arith.constant 0 : index
    %c0_111 = arith.constant 0 : index
    %99 = vector.load %arg7[%c0_109, %c0_110, %c0_111] : memref<1x1x128xf32, #tpu.memory_space<vmem>>, vector<1x1x128xf32>
    %100 = vector.shape_cast %99 : vector<1x1x128xf32> to vector<1x128xf32>
    %101 = vector.shape_cast %98 : vector<1x128xf32> to vector<1x1x128xf32>
    tpu.vector_store %arg7[%c0_109, %c0_110, %c0_111], %101 {strides = array<i32>} : memref<1x1x128xf32, #tpu.memory_space<vmem>>, vector<1x1x128xf32>,
    return
  }
  func.func @transform_0(%arg0: i32) -> (i32, i32, i32, i32) {
    %c0_i32 = arith.constant 0 : i32
    %c0_i32_0 = arith.constant 0 : i32
    %c0_i32_1 = arith.constant 0 : i32
    %c0_i32_2 = arith.constant 0 : i32
    return %arg0, %c0_i32, %c0_i32_0, %c0_i32_1 : i32, i32, i32, i32
  }
  func.func @transform_1(%arg0: i32) -> (i32, i32) {
    %c0_i32 = arith.constant 0 : i32
    %c0_i32_0 = arith.constant 0 : i32
    %c0_i32_1 = arith.constant 0 : i32
    return %c0_i32, %c0_i32_0 : i32, i32
  }
  func.func @transform_2(%arg0: i32) -> (i32, i32) {
    %c0_i32 = arith.constant 0 : i32
    %c0_i32_0 = arith.constant 0 : i32
    %c0_i32_1 = arith.constant 0 : i32
    return %c0_i32, %c0_i32_0 : i32, i32
  }
  func.func @transform_3(%arg0: i32) -> (i32, i32) {
    %c0_i32 = arith.constant 0 : i32
    %c0_i32_0 = arith.constant 0 : i32
    %c0_i32_1 = arith.constant 0 : i32
    return %c0_i32, %c0_i32_0 : i32, i32
  }
  func.func @transform_4(%arg0: i32) -> (i32, i32) {
    %c0_i32 = arith.constant 0 : i32
    %c0_i32_0 = arith.constant 0 : i32
    %c0_i32_1 = arith.constant 0 : i32
    return %c0_i32, %c0_i32_0 : i32, i32
  }
  func.func @transform_5(%arg0: i32) -> (i32, i32) {
    %c0_i32 = arith.constant 0 : i32
    %c0_i32_0 = arith.constant 0 : i32
    %c0_i32_1 = arith.constant 0 : i32
    return %c0_i32, %c0_i32_0 : i32, i32
  }
  func.func @transform_6(%arg0: i32) -> (i32, i32, i32) {
    %c0_i32 = arith.constant 0 : i32
    %c0_i32_0 = arith.constant 0 : i32
    %c0_i32_1 = arith.constant 0 : i32
    return %arg0, %c0_i32, %c0_i32_0 : i32, i32, i32
  }
}

</mosaic_0001>

<llo_original>
// kernel: localization_trainer_forward.1
$region0: #{localization_trainer_forward.1}
  #allocation0 [shape = 'u32[]', space=smem, size = 0x4, offset = 0x4, fixed_abs, tag = 'smem constant byte address 0x4 - core index']
  #allocation1 [shape = 'u32[144,128]{1,0:T(1,128)}', space=vmem, size = 0x12000, scoped, tag = 'internal scratch']
  #allocation2 [shape = 'f32[4,512]{1,0:T(4,128)}', space=vmem, size = 0x2000, scoped, tag = 'scratch operand']
  #allocation3 [shape = 'f32[36,256]{1,0:T(8,128)}', space=vmem, size = 0xa000, scoped, tag = 'scratch operand']
  %s0 = inlined_call_operand.hbm [shape: f32[2,4,16,16], index: 0, kind: input, shape index: {}]
  %s1 = inlined_call_operand.vmem [shape: f32[2,256], index: 1, kind: input, shape index: {}]
  %s2 = inlined_call_operand.vmem [shape: f32[8,36], index: 2, kind: input, shape index: {}]
  %s3 = inlined_call_operand.vmem [shape: f32[8,1], index: 3, kind: input, shape index: {}]
  %s4 = inlined_call_operand.vmem [shape: f32[8,128], index: 4, kind: input, shape index: {}]
  %s5 = inlined_call_operand.vmem [shape: f32[1,128], index: 5, kind: input, shape index: {}]
  %s6 = inlined_call_operand.hbm [shape: f32[2,1,128], index: 6, kind: output, shape index: {}]
  %s7 = sld [smem:[#allocation0]]
  $region61: #{localization_trainer_forward.1} parent=0
    _
  %s9 = ssub.s32 1, %s7
  %s10 = scalar_select 0, %s9, %s7
  $region1: #{localization_trainer_forward.1} parent=0
    #allocation4 [shape = 'u8[65536]{0}', space=vmem, size = 0x10000, scoped, tag = 'input window, operand 0']
    #allocation5 [shape = 's32[2]{0}', space=sflag, size = 0x8, scoped, tag = 'scoped memory for localization_trainer_forward.1']
    #allocation6 [shape = 's32[2]{0}', space=sflag, size = 0x8, scoped, tag = 'scoped memory for localization_trainer_forward.1']
    #allocation7 [shape = 'u8[1024]{0}', space=vmem, size = 0x400, scoped, tag = 'output window, operand 0']
    %11 = vsyncpa [#allocation5], 0
    %s12 = scalar_lea.sflag [#allocation5], 1
    %13 = vsyncpa %s12, 0
    %14 = vsyncpa [#allocation6], 0
    %s15 = scalar_lea.sflag [#allocation6], 1
    %16 = vsyncpa %s15, 0
    loop: start=0, step=1, limit=4
    $region2: #{localization_trainer_forward.1} parent=1 // loop_pre_header
      _
    $region3: #{localization_trainer_forward.1} parent=1 // loop_header
      %s18 = sphi 0, %s22
      %p19 = scmp.ge.s32.totalorder %s18, 4
      %s28 = sphi 0, %s30
      %s31 = sphi 0, %s28
      %s32 = sphi 0, %s31
      %s48 = sphi 0, %s32
      %s52 = sphi 0, %s52
      %s54 = sphi 0, %s52
      %s55 = sphi 0, %s54
      %s69 = sphi 0, %s55
      %s73 = sphi 0, %s73
      %s75 = sphi 0, %s73
      %s76 = sphi 0, %s75
      %s90 = sphi 0, %s76
      %s94 = sphi 0, %s94
      %s96 = sphi 0, %s94
      %s97 = sphi 0, %s96
      %s111 = sphi 0, %s97
      %s115 = sphi 0, %s115
      %s117 = sphi 0, %s115
      %s118 = sphi 0, %s117
      %s132 = sphi 0, %s118
      %s136 = sphi 0, %s136
      %s138 = sphi 0, %s136
      %s139 = sphi 0, %s138
      %s153 = sphi 0, %s139
      %s159 = sphi 0, %s161
      %s162 = sphi 0, %s159
      %s163 = sphi 0, %s162
      %s179 = sphi 0, %s163
    $region4: #{localization_trainer_forward.1} parent=1 // loop_header_branch
      %21 = sbr.rel (%p19) target = $region8
    $region5: #{localization_trainer_forward.1} parent=1 // loop_body
      %s23 = ssub.s32 %s18, 1
      %s24 = ssub.s32 %s18, 2
      %s25 = sadd.s32 %s18, 1
      %s26 = ssub.s32 %s18, %s25
      %p27 = scmp.eq.s32.totalorder %s26, 0
      %s29 = sadd.s32 %s28, 1
      %s30 = scalar_select %p27, %s28, %s29
      %p33 = pneg %p27
      %p34 = scmp.eq.s32.totalorder %s18, 1
      %p35 = por %p33, %p34
      %p36 = scmp.ne.s32.totalorder %s28, %s31
      %p37 = scmp.eq.s32.totalorder %s18, 0
      %p38 = por %p36, %p37
      %p39 = scmp.ne.s32.totalorder %s28, %s31
      %p40 = scmp.eq.s32.totalorder %s23, 1
      %p41 = por %p39, %p40
      %p42 = scmp.ne.s32.totalorder %s31, %s32
      %p43 = scmp.eq.s32.totalorder %s23, 0
      %p44 = por %p42, %p43
      %p45 = scmp.ne.s32.totalorder %s31, %s32
      %p46 = scmp.eq.s32.totalorder %s24, 1
      %p47 = por %p45, %p46
      %p49 = scmp.ne.s32.totalorder %s32, %s48
      %p50 = scmp.eq.s32.totalorder %s24, 0
      %p51 = por %p49, %p50
      %s53 = sadd.s32 %s52, 1
      %p56 = scmp.eq.s32.totalorder %s18, 1
      %p57 = scmp.ne.s32.totalorder %s52, %s54
      %p58 = scmp.eq.s32.totalorder %s18, 0
      %p59 = por %p57, %p58
      %p60 = scmp.ne.s32.totalorder %s52, %s54
      %p61 = scmp.eq.s32.totalorder %s23, 1
      %p62 = por %p60, %p61
      %p63 = scmp.ne.s32.totalorder %s54, %s55
      %p64 = scmp.eq.s32.totalorder %s23, 0
      %p65 = por %p63, %p64
      %p66 = scmp.ne.s32.totalorder %s54, %s55
      %p67 = scmp.eq.s32.totalorder %s24, 1
      %p68 = por %p66, %p67
      %p70 = scmp.ne.s32.totalorder %s55, %s69
      %p71 = scmp.eq.s32.totalorder %s24, 0
      %p72 = por %p70, %p71
      %s74 = sadd.s32 %s73, 1
      %p77 = scmp.eq.s32.totalorder %s18, 1
      %p78 = scmp.ne.s32.totalorder %s73, %s75
      %p79 = scmp.eq.s32.totalorder %s18, 0
      %p80 = por %p78, %p79
      %p81 = scmp.ne.s32.totalorder %s73, %s75
      %p82 = scmp.eq.s32.totalorder %s23, 1
      %p83 = por %p81, %p82
      %p84 = scmp.ne.s32.totalorder %s75, %s76
      %p85 = scmp.eq.s32.totalorder %s23, 0
      %p86 = por %p84, %p85
      %p87 = scmp.ne.s32.totalorder %s75, %s76
      %p88 = scmp.eq.s32.totalorder %s24, 1
      %p89 = por %p87, %p88
      %p91 = scmp.ne.s32.totalorder %s76, %s90
      %p92 = scmp.eq.s32.totalorder %s24, 0
      %p93 = por %p91, %p92
      %s95 = sadd.s32 %s94, 1
      %p98 = scmp.eq.s32.totalorder %s18, 1
      %p99 = scmp.ne.s32.totalorder %s94, %s96
      %p100 = scmp.eq.s32.totalorder %s18, 0
      %p101 = por %p99, %p100
      %p102 = scmp.ne.s32.totalorder %s94, %s96
      %p103 = scmp.eq.s32.totalorder %s23, 1
      %p104 = por %p102, %p103
      %p105 = scmp.ne.s32.totalorder %s96, %s97
      %p106 = scmp.eq.s32.totalorder %s23, 0
      %p107 = por %p105, %p106
      %p108 = scmp.ne.s32.totalorder %s96, %s97
      %p109 = scmp.eq.s32.totalorder %s24, 1
      %p110 = por %p108, %p109
      %p112 = scmp.ne.s32.totalorder %s97, %s111
      %p113 = scmp.eq.s32.totalorder %s24, 0
      %p114 = por %p112, %p113
      %s116 = sadd.s32 %s115, 1
      %p119 = scmp.eq.s32.totalorder %s18, 1
      %p120 = scmp.ne.s32.totalorder %s115, %s117
      %p121 = scmp.eq.s32.totalorder %s18, 0
      %p122 = por %p120, %p121
      %p123 = scmp.ne.s32.totalorder %s115, %s117
      %p124 = scmp.eq.s32.totalorder %s23, 1
      %p125 = por %p123, %p124
      %p126 = scmp.ne.s32.totalorder %s117, %s118
      %p127 = scmp.eq.s32.totalorder %s23, 0
      %p128 = por %p126, %p127
      %p129 = scmp.ne.s32.totalorder %s117, %s118
      %p130 = scmp.eq.s32.totalorder %s24, 1
      %p131 = por %p129, %p130
      %p133 = scmp.ne.s32.totalorder %s118, %s132
      %p134 = scmp.eq.s32.totalorder %s24, 0
      %p135 = por %p133, %p134
      %s137 = sadd.s32 %s136, 1
      %p140 = scmp.eq.s32.totalorder %s18, 1
      %p141 = scmp.ne.s32.totalorder %s136, %s138
      %p142 = scmp.eq.s32.totalorder %s18, 0
      %p143 = por %p141, %p142
      %p144 = scmp.ne.s32.totalorder %s136, %s138
      %p145 = scmp.eq.s32.totalorder %s23, 1
      %p146 = por %p144, %p145
      %p147 = scmp.ne.s32.totalorder %s138, %s139
      %p148 = scmp.eq.s32.totalorder %s23, 0
      %p149 = por %p147, %p148
      %p150 = scmp.ne.s32.totalorder %s138, %s139
      %p151 = scmp.eq.s32.totalorder %s24, 1
      %p152 = por %p150, %p151
      %p154 = scmp.ne.s32.totalorder %s139, %s153
      %p155 = scmp.eq.s32.totalorder %s24, 0
      %p156 = por %p154, %p155
      %s157 = ssub.s32 %s18, %s25
      %p158 = scmp.eq.s32.totalorder %s157, 0
      %s160 = sadd.s32 %s159, 1
      %s161 = scalar_select %p158, %s159, %s160
      %p164 = pneg %p158
      %p165 = scmp.eq.s32.totalorder %s18, 1
      %p166 = por %p164, %p165
      %p167 = scmp.ne.s32.totalorder %s159, %s162
      %p168 = scmp.eq.s32.totalorder %s18, 0
      %p169 = por %p167, %p168
      %p170 = scmp.ne.s32.totalorder %s159, %s162
      %p171 = scmp.eq.s32.totalorder %s23, 1
      %p172 = por %p170, %p171
      %p173 = scmp.ne.s32.totalorder %s162, %s163
      %p174 = scmp.eq.s32.totalorder %s23, 0
      %p175 = por %p173, %p174
      %p176 = scmp.ne.s32.totalorder %s162, %s163
      %p177 = scmp.eq.s32.totalorder %s24, 1
      %p178 = por %p176, %p177
      %p180 = scmp.ne.s32.totalorder %s163, %s179
      %p181 = scmp.eq.s32.totalorder %s24, 0
      %p182 = por %p180, %p181
      %p183 = scmp.le.s32.totalorder 1, %s18
      %p184 = scmp.lt.s32.totalorder %s18, 3
      %p185 = pnand %p183, %p184
      %p186 = pneg %p185
      // Predicated region
      $region9: #{localization_trainer_forward.1} parent=5 // pred_check
        _
      $region10: #{localization_trainer_forward.1} parent=5 // pred_check_branch
        %188 = sbr.rel (%p185) target = $region12
      $region11: #{localization_trainer_forward.1} parent=5 // pred_region
        %s189 = ssub.s32 %s18, 1
        // Predicated region
        $region13: #{localization_trainer_forward.1} parent=11 // pred_check
          %p190 = pneg %p65
        $region14: #{localization_trainer_forward.1} parent=11 // pred_check_branch
          %192 = sbr.rel (%p190) target = $region16
        $region15: #{localization_trainer_forward.1} parent=11 // pred_region
          _
        $region16: #{localization_trainer_forward.1} parent=11 // pred_fallthru
          _
        // Predicated region
        $region17: #{localization_trainer_forward.1} parent=11 // pred_check
          %p193 = pneg %p86
        $region18: #{localization_trainer_forward.1} parent=11 // pred_check_branch
          %195 = sbr.rel (%p193) target = $region20
        $region19: #{localization_trainer_forward.1} parent=11 // pred_region
          _
        $region20: #{localization_trainer_forward.1} parent=11 // pred_fallthru
          _
        // Predicated region
        $region21: #{localization_trainer_forward.1} parent=11 // pred_check
          %p196 = pneg %p107
        $region22: #{localization_trainer_forward.1} parent=11 // pred_check_branch
          %198 = sbr.rel (%p196) target = $region24
        $region23: #{localization_trainer_forward.1} parent=11 // pred_region
          _
        $region24: #{localization_trainer_forward.1} parent=11 // pred_fallthru
          _
        // Predicated region
        $region25: #{localization_trainer_forward.1} parent=11 // pred_check
          %p199 = pneg %p128
        $region26: #{localization_trainer_forward.1} parent=11 // pred_check_branch
          %201 = sbr.rel (%p199) target = $region28
        $region27: #{localization_trainer_forward.1} parent=11 // pred_region
          _
        $region28: #{localization_trainer_forward.1} parent=11 // pred_fallthru
          _
        // Predicated region
        $region29: #{localization_trainer_forward.1} parent=11 // pred_check
          %p202 = pneg %p149
        $region30: #{localization_trainer_forward.1} parent=11 // pred_check_branch
          %204 = sbr.rel (%p202) target = $region32
        $region31: #{localization_trainer_forward.1} parent=11 // pred_region
          _
        $region32: #{localization_trainer_forward.1} parent=11 // pred_fallthru
          _
      $region12: #{localization_trainer_forward.1} parent=5 // pred_fallthru
        _
      %p205 = scmp.lt.s32.totalorder %s18, 2
      // Predicated region
      $region33: #{localization_trainer_forward.1} parent=5 // pred_check
        %p206 = pneg %p205
      $region34: #{localization_trainer_forward.1} parent=5 // pred_check_branch
        %208 = sbr.rel (%p206) target = $region36
      $region35: #{localization_trainer_forward.1} parent=5 // pred_region
        // Predicated region
        $region37: #{localization_trainer_forward.1} parent=35 // pred_check
          %p209 = pneg %p38
        $region38: #{localization_trainer_forward.1} parent=35 // pred_check_branch
          %211 = sbr.rel (%p209) target = $region40
        $region39: #{localization_trainer_forward.1} parent=35 // pred_region
          %s212 = sand.u32 %s28, 1
          %s213 = scalar_lea.sflag [#allocation5], %s212
          %s214 = sand.u32 %s28, 1
          %s215 = smul.addr %s214, 64
          %s216 = scalar_lea.vmem [#allocation4], %s215
          %s218 = ssub.s32 1024, 1024
          %219 = vsyncadd %s213, %s218
          %s220 = smul.addr %s18, 8
          %s221 = smul.addr %s220, 128
          %s222 = scalar_lea.hbm %s0, %s221
          %s223 = sshll.u32 %s216, 4
          %s224 = int_to_ptr.vmem [resolvable:$true] %s223
          %229 = dma.hbm_to_vmem [thread:$0]  %s222, 1024, %s224, %s213, 128, 128, 8
        $region40: #{localization_trainer_forward.1} parent=35 // pred_fallthru
          _
      $region36: #{localization_trainer_forward.1} parent=5 // pred_fallthru
        _
      %p230 = scmp.le.s32.totalorder 1, %s18
      %p231 = scmp.lt.s32.totalorder %s18, 3
      %p232 = pnand %p230, %p231
      %p233 = pneg %p232
      // Predicated region
      $region41: #{localization_trainer_forward.1} parent=5 // pred_check
        _
      $region42: #{localization_trainer_forward.1} parent=5 // pred_check_branch
        %235 = sbr.rel (%p232) target = $region44
      $region43: #{localization_trainer_forward.1} parent=5 // pred_region
        %s236 = ssub.s32 %s18, 1
        %s237 = sand.u32 %s31, 1
        %s238 = scalar_lea.sflag [#allocation5], %s237
        %s239 = sand.u32 %s31, 1
        %s240 = smul.addr %s239, 64
        %s241 = scalar_lea.vmem [#allocation4], %s240
        // Predicated region
        $region45: #{localization_trainer_forward.1} parent=43 // pred_check
          %p242 = pneg %p44
        $region46: #{localization_trainer_forward.1} parent=43 // pred_check_branch
          %244 = sbr.rel (%p242) target = $region48
        $region47: #{localization_trainer_forward.1} parent=43 // pred_region
          %245 = dma.done %s238, 1024
        $region48: #{localization_trainer_forward.1} parent=43 // pred_fallthru
          _
        %s246 = sand.u32 %s31, 1
        %s247 = scalar_lea.sflag [#allocation5], %s246
        %s248 = sand.u32 %s31, 1
        %s249 = smul.addr %s248, 64
        %s250 = scalar_lea.vmem [#allocation4], %s249
        %p251 = pneg %p44
        %p252 = pneg %p41
        %p253 = pneg %p65
        %p254 = pneg %p62
        %p255 = pneg %p86
        %p256 = pneg %p83
        %p257 = pneg %p107
        %p258 = pneg %p104
        %p259 = pneg %p128
        %p260 = pneg %p125
        %p261 = pneg %p149
        %p262 = pneg %p146
        %p263 = pneg %p175
        %p264 = pneg %p172
        %s265 = sand.u32 %s162, 1
        %s266 = scalar_lea.sflag [#allocation6], %s265
        %s267 = sand.u32 %s162, 1
        %s268 = scalar_lea.vmem [#allocation7], %s267
        %269 = vst [vmem:[#allocation2] sm:$0xff] 0.0
        %270 = vst [vmem:[#allocation2 + $0x8] sm:$0xff] 0.0
        %v271 = vld [vmem:[%s1] ss:$2 sm:$0x3]
        %s272 = scalar_lea.vmem %s1, 1
        %v273 = vld [vmem:[%s272] ss:$2 sm:$0x3]
        %v274 = vld [vmem:[%s241] sm:$0x1]
        %v275 = vld [vmem:[%s241 + $0x10] sm:$0x1]
        %v276 = vld [vmem:[%s241 + $0x20] sm:$0x1]
        %v277 = vld [vmem:[%s241 + $0x30] sm:$0x1]
        %v282 = vrot.slane %v275, 7
        %vm283 = vcmask 1041409
        %v284 = vsel %vm283, %v282, %v274
        %vm285 = vcmask 1045509
        %v286 = vsel %vm285, %v282, %v284
        %v287 = vrot.slane %v276, 6
        %vm288 = vcmask 1042434
        %v289 = vsel %vm288, %v287, %v286
        %vm290 = vcmask 1046534
        %v291 = vsel %vm290, %v287, %v289
        %v292 = vrot.slane %v277, 5
        %vm293 = vcmask 1043459
        %v294 = vsel %vm293, %v292, %v291
        %vm295 = vcmask 1047559
        %v296 = vsel %vm295, %v292, %v294
        %vm298 = vcmask 125952
        %299 = vst.msk [vmem:[#allocation2 + $0x4] sm:$0xf] %vm298, %v296
        %v300 = vld [vmem:[%s241 + $0x1] sm:$0x1]
        %v301 = vld [vmem:[%s241 + $0x11] sm:$0x1]
        %v302 = vld [vmem:[%s241 + $0x21] sm:$0x1]
        %v303 = vld [vmem:[%s241 + $0x31] sm:$0x1]
        %v308 = vrot.slane %v301, 7
        %v309 = vsel %vm283, %v308, %v300
        %v310 = vsel %vm285, %v308, %v309
        %v311 = vrot.slane %v302, 6
        %v312 = vsel %vm288, %v311, %v310
        %v313 = vsel %vm290, %v311, %v312
        %v314 = vrot.slane %v303, 5
        %v315 = vsel %vm293, %v314, %v313
        %v316 = vsel %vm295, %v314, %v315
        %317 = vrot.lane.b32.xlu0 %v316, 16
        %v318 = vpop.permute.xlu0 %317
        %vm320 = vcmask 257152
        %321 = vst.msk [vmem:[#allocation2 + $0x4] sm:$0xf] %vm320, %v318
        %v322 = vld [vmem:[%s241 + $0x2] sm:$0x1]
        %v323 = vld [vmem:[%s241 + $0x12] sm:$0x1]
        %v324 = vld [vmem:[%s241 + $0x22] sm:$0x1]
        %v325 = vld [vmem:[%s241 + $0x32] sm:$0x1]
        %v330 = vrot.slane %v323, 7
        %v331 = vsel %vm283, %v330, %v322
        %v332 = vsel %vm285, %v330, %v331
        %v333 = vrot.slane %v324, 6
        %v334 = vsel %vm288, %v333, %v332
        %v335 = vsel %vm290, %v333, %v334
        %v336 = vrot.slane %v325, 5
        %v337 = vsel %vm293, %v336, %v335
        %v338 = vsel %vm295, %v336, %v337
        %339 = vrot.lane.b32.xlu0 %v338, 32
        %v340 = vpop.permute.xlu0 %339
        %vm342 = vcmask 388352
        %343 = vst.msk [vmem:[#allocation2 + $0x4] sm:$0xf] %vm342, %v340
        %v344 = vld [vmem:[%s241 + $0x3] sm:$0x1]
        %v345 = vld [vmem:[%s241 + $0x13] sm:$0x1]
        %v346 = vld [vmem:[%s241 + $0x23] sm:$0x1]
        %v347 = vld [vmem:[%s241 + $0x33] sm:$0x1]
        %v352 = vrot.slane %v345, 7
        %v353 = vsel %vm283, %v352, %v344
        %v354 = vsel %vm285, %v352, %v353
        %v355 = vrot.slane %v346, 6
        %v356 = vsel %vm288, %v355, %v354
        %v357 = vsel %vm290, %v355, %v356
        %v358 = vrot.slane %v347, 5
        %v359 = vsel %vm293, %v358, %v357
        %v360 = vsel %vm295, %v358, %v359
        %361 = vrot.lane.b32.xlu0 %v360, 48
        %v362 = vpop.permute.xlu0 %361
        %vm364 = vcmask 519552
        %365 = vst.msk [vmem:[#allocation2 + $0x4] sm:$0xf] %vm364, %v362
        %v366 = vld [vmem:[%s241 + $0x4] sm:$0x1]
        %v367 = vld [vmem:[%s241 + $0x14] sm:$0x1]
        %v368 = vld [vmem:[%s241 + $0x24] sm:$0x1]
        %v369 = vld [vmem:[%s241 + $0x34] sm:$0x1]
        %v374 = vrot.slane %v367, 7
        %v375 = vsel %vm283, %v374, %v366
        %v376 = vsel %vm285, %v374, %v375
        %v377 = vrot.slane %v368, 6
        %v378 = vsel %vm288, %v377, %v376
        %v379 = vsel %vm290, %v377, %v378
        %v380 = vrot.slane %v369, 5
        %v381 = vsel %vm293, %v380, %v379
        %v382 = vsel %vm295, %v380, %v381
        %383 = vrot.lane.b32.xlu0 %v382, 64
        %v384 = vpop.permute.xlu0 %383
        %vm386 = vcmask 650752
        %387 = vst.msk [vmem:[#allocation2 + $0x4] sm:$0xf] %vm386, %v384
        %v388 = vld [vmem:[%s241 + $0x5] sm:$0x1]
        %v389 = vld [vmem:[%s241 + $0x15] sm:$0x1]
        %v390 = vld [vmem:[%s241 + $0x25] sm:$0x1]
        %v391 = vld [vmem:[%s241 + $0x35] sm:$0x1]
        %v396 = vrot.slane %v389, 7
        %v397 = vsel %vm283, %v396, %v388
        %v398 = vsel %vm285, %v396, %v397
        %v399 = vrot.slane %v390, 6
        %v400 = vsel %vm288, %v399, %v398
        %v401 = vsel %vm290, %v399, %v400
        %v402 = vrot.slane %v391, 5
        %v403 = vsel %vm293, %v402, %v401
        %v404 = vsel %vm295, %v402, %v403
        %405 = vrot.lane.b32.xlu0 %v404, 80
        %v406 = vpop.permute.xlu0 %405
        %vm408 = vcmask 781952
        %409 = vst.msk [vmem:[#allocation2 + $0x4] sm:$0xf] %vm408, %v406
        %v410 = vld [vmem:[%s241 + $0x6] sm:$0x1]
        %v411 = vld [vmem:[%s241 + $0x16] sm:$0x1]
        %v412 = vld [vmem:[%s241 + $0x26] sm:$0x1]
        %v413 = vld [vmem:[%s241 + $0x36] sm:$0x1]
        %v418 = vrot.slane %v411, 7
        %v419 = vsel %vm283, %v418, %v410
        %v420 = vsel %vm285, %v418, %v419
        %v421 = vrot.slane %v412, 6
        %v422 = vsel %vm288, %v421, %v420
        %v423 = vsel %vm290, %v421, %v422
        %v424 = vrot.slane %v413, 5
        %v425 = vsel %vm293, %v424, %v423
        %v426 = vsel %vm295, %v424, %v425
        %427 = vrot.lane.b32.xlu0 %v426, 96
        %v428 = vpop.permute.xlu0 %427
        %vm430 = vcmask 913152
        %431 = vst.msk [vmem:[#allocation2 + $0x4] sm:$0xf] %vm430, %v428
        %v432 = vld [vmem:[%s241 + $0x7] sm:$0x1]
        %v433 = vld [vmem:[%s241 + $0x17] sm:$0x1]
        %v434 = vld [vmem:[%s241 + $0x27] sm:$0x1]
        %v435 = vld [vmem:[%s241 + $0x37] sm:$0x1]
        %v440 = vrot.slane %v433, 7
        %v441 = vsel %vm283, %v440, %v432
        %v442 = vsel %vm285, %v440, %v441
        %v443 = vrot.slane %v434, 6
        %v444 = vsel %vm288, %v443, %v442
        %v445 = vsel %vm290, %v443, %v444
        %v446 = vrot.slane %v435, 5
        %v447 = vsel %vm293, %v446, %v445
        %v448 = vsel %vm295, %v446, %v447
        %449 = vrot.lane.b32.xlu0 %v448, 112
        %v450 = vpop.permute.xlu0 %449
        %vm452 = vcmask 1044352
        %453 = vst.msk [vmem:[#allocation2 + $0x4] sm:$0xf] %vm452, %v450
        %v454 = vld [vmem:[%s241 + $0x8] sm:$0x1]
        %v455 = vld [vmem:[%s241 + $0x18] sm:$0x1]
        %v456 = vld [vmem:[%s241 + $0x28] sm:$0x1]
        %v457 = vld [vmem:[%s241 + $0x38] sm:$0x1]
        %v462 = vrot.slane %v455, 7
        %v463 = vsel %vm283, %v462, %v454
        %v464 = vsel %vm285, %v462, %v463
        %v465 = vrot.slane %v456, 6
        %v466 = vsel %vm288, %v465, %v464
        %v467 = vsel %vm290, %v465, %v466
        %v468 = vrot.slane %v457, 5
        %v469 = vsel %vm293, %v468, %v467
        %v470 = vsel %vm295, %v468, %v469
        %472 = vst.msk [vmem:[#allocation2 + $0x8] sm:$0xf] %vm298, %v470
        %v473 = vld [vmem:[%s241 + $0x9] sm:$0x1]
        %v474 = vld [vmem:[%s241 + $0x19] sm:$0x1]
        %v475 = vld [vmem:[%s241 + $0x29] sm:$0x1]
        %v476 = vld [vmem:[%s241 + $0x39] sm:$0x1]
        %v481 = vrot.slane %v474, 7
        %v482 = vsel %vm283, %v481, %v473
        %v483 = vsel %vm285, %v481, %v482
        %v484 = vrot.slane %v475, 6
        %v485 = vsel %vm288, %v484, %v483
        %v486 = vsel %vm290, %v484, %v485
        %v487 = vrot.slane %v476, 5
        %v488 = vsel %vm293, %v487, %v486
        %v489 = vsel %vm295, %v487, %v488
        %490 = vrot.lane.b32.xlu0 %v489, 16
        %v491 = vpop.permute.xlu0 %490
        %493 = vst.msk [vmem:[#allocation2 + $0x8] sm:$0xf] %vm320, %v491
        %v494 = vld [vmem:[%s241 + $0xa] sm:$0x1]
        %v495 = vld [vmem:[%s241 + $0x1a] sm:$0x1]
        %v496 = vld [vmem:[%s241 + $0x2a] sm:$0x1]
        %v497 = vld [vmem:[%s241 + $0x3a] sm:$0x1]
        %v502 = vrot.slane %v495, 7
        %v503 = vsel %vm283, %v502, %v494
        %v504 = vsel %vm285, %v502, %v503
        %v505 = vrot.slane %v496, 6
        %v506 = vsel %vm288, %v505, %v504
        %v507 = vsel %vm290, %v505, %v506
        %v508 = vrot.slane %v497, 5
        %v509 = vsel %vm293, %v508, %v507
        %v510 = vsel %vm295, %v508, %v509
        %511 = vrot.lane.b32.xlu0 %v510, 32
        %v512 = vpop.permute.xlu0 %511
        %514 = vst.msk [vmem:[#allocation2 + $0x8] sm:$0xf] %vm342, %v512
        %v515 = vld [vmem:[%s241 + $0xb] sm:$0x1]
        %v516 = vld [vmem:[%s241 + $0x1b] sm:$0x1]
        %v517 = vld [vmem:[%s241 + $0x2b] sm:$0x1]
        %v518 = vld [vmem:[%s241 + $0x3b] sm:$0x1]
        %v523 = vrot.slane %v516, 7
        %v524 = vsel %vm283, %v523, %v515
        %v525 = vsel %vm285, %v523, %v524
        %v526 = vrot.slane %v517, 6
        %v527 = vsel %vm288, %v526, %v525
        %v528 = vsel %vm290, %v526, %v527
        %v529 = vrot.slane %v518, 5
        %v530 = vsel %vm293, %v529, %v528
        %v531 = vsel %vm295, %v529, %v530
        %532 = vrot.lane.b32.xlu0 %v531, 48
        %v533 = vpop.permute.xlu0 %532
        %535 = vst.msk [vmem:[#allocation2 + $0x8] sm:$0xf] %vm364, %v533
        %v536 = vld [vmem:[%s241 + $0xc] sm:$0x1]
        %v537 = vld [vmem:[%s241 + $0x1c] sm:$0x1]
        %v538 = vld [vmem:[%s241 + $0x2c] sm:$0x1]
        %v539 = vld [vmem:[%s241 + $0x3c] sm:$0x1]
        %v544 = vrot.slane %v537, 7
        %v545 = vsel %vm283, %v544, %v536
        %v546 = vsel %vm285, %v544, %v545
        %v547 = vrot.slane %v538, 6
        %v548 = vsel %vm288, %v547, %v546
        %v549 = vsel %vm290, %v547, %v548
        %v550 = vrot.slane %v539, 5
        %v551 = vsel %vm293, %v550, %v549
        %v552 = vsel %vm295, %v550, %v551
        %553 = vrot.lane.b32.xlu0 %v552, 64
        %v554 = vpop.permute.xlu0 %553
        %556 = vst.msk [vmem:[#allocation2 + $0x8] sm:$0xf] %vm386, %v554
        %v557 = vld [vmem:[%s241 + $0xd] sm:$0x1]
        %v558 = vld [vmem:[%s241 + $0x1d] sm:$0x1]
        %v559 = vld [vmem:[%s241 + $0x2d] sm:$0x1]
        %v560 = vld [vmem:[%s241 + $0x3d] sm:$0x1]
        %v565 = vrot.slane %v558, 7
        %v566 = vsel %vm283, %v565, %v557
        %v567 = vsel %vm285, %v565, %v566
        %v568 = vrot.slane %v559, 6
        %v569 = vsel %vm288, %v568, %v567
        %v570 = vsel %vm290, %v568, %v569
        %v571 = vrot.slane %v560, 5
        %v572 = vsel %vm293, %v571, %v570
        %v573 = vsel %vm295, %v571, %v572
        %574 = vrot.lane.b32.xlu0 %v573, 80
        %v575 = vpop.permute.xlu0 %574
        %577 = vst.msk [vmem:[#allocation2 + $0x8] sm:$0xf] %vm408, %v575
        %v578 = vld [vmem:[%s241 + $0xe] sm:$0x1]
        %v579 = vld [vmem:[%s241 + $0x1e] sm:$0x1]
        %v580 = vld [vmem:[%s241 + $0x2e] sm:$0x1]
        %v581 = vld [vmem:[%s241 + $0x3e] sm:$0x1]
        %v586 = vrot.slane %v579, 7
        %v587 = vsel %vm283, %v586, %v578
        %v588 = vsel %vm285, %v586, %v587
        %v589 = vrot.slane %v580, 6
        %v590 = vsel %vm288, %v589, %v588
        %v591 = vsel %vm290, %v589, %v590
        %v592 = vrot.slane %v581, 5
        %v593 = vsel %vm293, %v592, %v591
        %v594 = vsel %vm295, %v592, %v593
        %595 = vrot.lane.b32.xlu0 %v594, 96
        %v596 = vpop.permute.xlu0 %595
        %598 = vst.msk [vmem:[#allocation2 + $0x8] sm:$0xf] %vm430, %v596
        %v599 = vld [vmem:[%s241 + $0xf] sm:$0x1]
        %v600 = vld [vmem:[%s241 + $0x1f] sm:$0x1]
        %v601 = vld [vmem:[%s241 + $0x2f] sm:$0x1]
        %v602 = vld [vmem:[%s241 + $0x3f] sm:$0x1]
        %v607 = vrot.slane %v600, 7
        %v608 = vsel %vm283, %v607, %v599
        %v609 = vsel %vm285, %v607, %v608
        %v610 = vrot.slane %v601, 6
        %v611 = vsel %vm288, %v610, %v609
        %v612 = vsel %vm290, %v610, %v611
        %v613 = vrot.slane %v602, 5
        %v614 = vsel %vm293, %v613, %v612
        %v615 = vsel %vm295, %v613, %v614
        %616 = vrot.lane.b32.xlu0 %v615, 112
        %v617 = vpop.permute.xlu0 %616
        %619 = vst.msk [vmem:[#allocation2 + $0x8] sm:$0xf] %vm452, %v617
        %v620 = vld [vmem:[#allocation2] sm:$0xff]
        %v621 = vld [vmem:[#allocation2 + $0x8] sm:$0xf]
        %v623 = vlaneseq
        %v624 = vshrl.u32 %v623, 7
        %v625 = vsub.s32 0, %v624
        %v626 = vrot.slane %v271, %v625
        %v627 = vlaneseq
        %v628 = vshrl.u32 %v627, 7
        %v629 = vsub.s32 1, %v628
        %v630 = vrot.slane %v271, %v629
        %v631 = vcombine.low %v626, %v630
        %632 = vrot.lane.b32.xlu0 %v631, 111
        %v633 = vpop.permute.xlu0 %632
        %v634 = vrot.slane %v633, 4
        %vm635 = vcmask 908288
        %v636 = vsel %vm635, %v634, %v633
        %v639 = vmul.f32 %v620, %v636
        %v640 = vmul.f32 %v621, %v634
        %v643 = vcombine.high %v639, %v639
        %644 = vrot.lane.b32.xlu0 %v639, 17
        %v645 = vpop.permute.xlu0 %644
        %646 = vrot.lane.b32.xlu0 %v643, 17
        %v647 = vpop.permute.xlu0 %646
        %648 = vrot.lane.b32.xlu0 %v640, 17
        %v649 = vpop.permute.xlu0 %648
        %vm650 = vcmask 138240
        %v651 = vsel %vm650, %v645, %v647
        %v652 = vsel %vm650, %v647, %v649
        %655 = vst [vmem:[#allocation3] sm:$0xf] %v651
        %656 = vst [vmem:[#allocation3 + $0x8] sm:$0xf] %v652
        %v657 = vld [vmem:[#allocation2] sm:$0xff]
        %v658 = vld [vmem:[#allocation2 + $0x8] sm:$0xf]
        %v661 = vcombine.low %v657, %v657
        %v662 = vcombine.low %v658, %v658
        %663 = vrot.lane.b32.xlu0 %v661, 16
        %v664 = vpop.permute.xlu0 %663
        %665 = vrot.lane.b32.xlu0 %v657, 16
        %v666 = vpop.permute.xlu0 %665
        %667 = vrot.lane.b32.xlu0 %v662, 16
        %v668 = vpop.permute.xlu0 %667
        %vm669 = vcmask 130048
        %v670 = vsel %vm669, %v664, %v666
        %v671 = vsel %vm669, %v666, %v668
        %674 = vst [vmem:[#allocation3] sm:$0xf0] %v670
        %675 = vst [vmem:[#allocation3 + $0x8] sm:$0xf0] %v671
        %v676 = vld [vmem:[#allocation2] sm:$0xff]
        %v677 = vld [vmem:[#allocation2 + $0x8] sm:$0xf]
        %v679 = vlaneseq
        %v680 = vshrl.u32 %v679, 7
        %v681 = vsub.s32 0, %v680
        %v682 = vrot.slane %v273, %v681
        %v683 = vlaneseq
        %v684 = vshrl.u32 %v683, 7
        %v685 = vsub.s32 1, %v684
        %v686 = vrot.slane %v273, %v685
        %v687 = vcombine.low %v682, %v686
        %688 = vrot.lane.b32.xlu0 %v687, 113
        %v689 = vpop.permute.xlu0 %688
        %v690 = vrot.slane %v689, 4
        %vm691 = vcmask 924672
        %v692 = vsel %vm691, %v690, %v689
        %v695 = vmul.f32 %v676, %v692
        %v696 = vmul.f32 %v677, %v690
        %v699 = vcombine.high %v695, %v695
        %700 = vrot.lane.b32.xlu0 %v695, 15
        %v701 = vpop.permute.xlu0 %700
        %702 = vrot.lane.b32.xlu0 %v699, 15
        %v703 = vpop.permute.xlu0 %702
        %704 = vrot.lane.b32.xlu0 %v696, 15
        %v705 = vpop.permute.xlu0 %704
        %vm706 = vcmask 121856
        %v707 = vsel %vm706, %v701, %v703
        %v708 = vsel %vm706, %v703, %v705
        %711 = vst [vmem:[#allocation3 + $0x10] sm:$0xf] %v707
        %712 = vst [vmem:[#allocation3 + $0x18] sm:$0xf] %v708
        %v713 = vld [vmem:[#allocation2] sm:$0xff]
        %v714 = vld [vmem:[#allocation2 + $0x8] sm:$0xf]
        %715 = vrot.lane.b32.xlu0 %v631, 127
        %v716 = vpop.permute.xlu0 %715
        %v717 = vrot.slane %v716, 4
        %vm718 = vcmask 1039360
        %v719 = vsel %vm718, %v717, %v716
        %v722 = vmul.f32 %v713, %v719
        %v723 = vmul.f32 %v714, %v717
        %v726 = vcombine.low %v722, %v722
        %v727 = vcombine.low %v723, %v723
        %728 = vrot.lane.b32.xlu0 %v726, 1
        %v729 = vpop.permute.xlu0 %728
        %730 = vrot.lane.b32.xlu0 %v722, 1
        %v731 = vpop.permute.xlu0 %730
        %732 = vrot.lane.b32.xlu0 %v727, 1
        %v733 = vpop.permute.xlu0 %732
        %vm734 = vcmask 7168
        %v735 = vsel %vm734, %v729, %v731
        %v736 = vsel %vm734, %v731, %v733
        %739 = vst [vmem:[#allocation3 + $0x10] sm:$0xf0] %v735
        %740 = vst [vmem:[#allocation3 + $0x18] sm:$0xf0] %v736
        %v741 = vld [vmem:[#allocation2 + $0x4] sm:$0xff]
        %v743 = vcombine.high %v741, %v741
        %745 = vst [vmem:[#allocation3 + $0x20] sm:$0xf] %v741
        %746 = vst [vmem:[#allocation3 + $0x28] sm:$0xf] %v743
        %v747 = vld [vmem:[#allocation2 + $0x4] sm:$0xff]
        %v748 = vld [vmem:[#allocation2 + $0xc] sm:$0xf]
        %749 = vrot.lane.b32.xlu0 %v687, 1
        %v750 = vpop.permute.xlu0 %749
        %v751 = vrot.slane %v750, 4
        %v752 = vsel %vm734, %v751, %v750
        %v755 = vmul.f32 %v747, %v752
        %v756 = vmul.f32 %v748, %v751
        %v759 = vcombine.low %v755, %v755
        %v760 = vcombine.low %v756, %v756
        %761 = vrot.lane.b32.xlu0 %v759, 127
        %v762 = vpop.permute.xlu0 %761
        %763 = vrot.lane.b32.xlu0 %v755, 127
        %v764 = vpop.permute.xlu0 %763
        %765 = vrot.lane.b32.xlu0 %v760, 127
        %v766 = vpop.permute.xlu0 %765
        %v767 = vsel %vm718, %v762, %v764
        %v768 = vsel %vm718, %v764, %v766
        %771 = vst [vmem:[#allocation3 + $0x20] sm:$0xf0] %v767
        %772 = vst [vmem:[#allocation3 + $0x28] sm:$0xf0] %v768
        %v773 = vld [vmem:[#allocation2 + $0x4] sm:$0xff]
        %v774 = vld [vmem:[#allocation2 + $0xc] sm:$0xf]
        %775 = vrot.lane.b32.xlu0 %v631, 15
        %v776 = vpop.permute.xlu0 %775
        %v777 = vrot.slane %v776, 4
        %v778 = vsel %vm706, %v777, %v776
        %v781 = vmul.f32 %v773, %v778
        %v782 = vmul.f32 %v774, %v777
        %v785 = vcombine.high %v781, %v781
        %786 = vrot.lane.b32.xlu0 %v781, 113
        %v787 = vpop.permute.xlu0 %786
        %788 = vrot.lane.b32.xlu0 %v785, 113
        %v789 = vpop.permute.xlu0 %788
        %790 = vrot.lane.b32.xlu0 %v782, 113
        %v791 = vpop.permute.xlu0 %790
        %v792 = vsel %vm691, %v787, %v789
        %v793 = vsel %vm691, %v789, %v791
        %796 = vst [vmem:[#allocation3 + $0x30] sm:$0xf] %v792
        %797 = vst [vmem:[#allocation3 + $0x38] sm:$0xf] %v793
        %v798 = vld [vmem:[#allocation2 + $0x4] sm:$0xff]
        %v799 = vld [vmem:[#allocation2 + $0xc] sm:$0xf]
        %v802 = vcombine.low %v798, %v798
        %v803 = vcombine.low %v799, %v799
        %804 = vrot.lane.b32.xlu0 %v802, 112
        %v805 = vpop.permute.xlu0 %804
        %806 = vrot.lane.b32.xlu0 %v798, 112
        %v807 = vpop.permute.xlu0 %806
        %808 = vrot.lane.b32.xlu0 %v803, 112
        %v809 = vpop.permute.xlu0 %808
        %vm810 = vcmask 916480
        %v811 = vsel %vm810, %v805, %v807
        %v812 = vsel %vm810, %v807, %v809
        %815 = vst [vmem:[#allocation3 + $0x30] sm:$0xf0] %v811
        %816 = vst [vmem:[#allocation3 + $0x38] sm:$0xf0] %v812
        %v817 = vld [vmem:[#allocation2 + $0x4] sm:$0xff]
        %v818 = vld [vmem:[#allocation2 + $0xc] sm:$0xf]
        %819 = vrot.lane.b32.xlu0 %v687, 17
        %v820 = vpop.permute.xlu0 %819
        %v821 = vrot.slane %v820, 4
        %v822 = vsel %vm650, %v821, %v820
        %v825 = vmul.f32 %v817, %v822
        %v826 = vmul.f32 %v818, %v821
        %v829 = vcombine.high %v825, %v825
        %830 = vrot.lane.b32.xlu0 %v825, 111
        %v831 = vpop.permute.xlu0 %830
        %832 = vrot.lane.b32.xlu0 %v829, 111
        %v833 = vpop.permute.xlu0 %832
        %834 = vrot.lane.b32.xlu0 %v826, 111
        %v835 = vpop.permute.xlu0 %834
        %v836 = vsel %vm635, %v831, %v833
        %v837 = vsel %vm635, %v833, %v835
        %840 = vst [vmem:[#allocation3 + $0x40] sm:$0xf] %v836
        %841 = vst [vmem:[#allocation3 + $0x48] sm:$0xf] %v837
        %v842 = vld [vmem:[%s2] sm:$0xff]
        %v843 = vld [vmem:[#allocation3] sm:$0xff]
        %v844 = vld [vmem:[#allocation3 + $0x8] sm:$0xff]
        %v845 = vld [vmem:[#allocation3 + $0x10] sm:$0xff]
        %v846 = vld [vmem:[#allocation3 + $0x18] sm:$0xff]
        %v847 = vld [vmem:[#allocation3 + $0x20] sm:$0xff]
        %v848 = vld [vmem:[#allocation3 + $0x28] sm:$0xff]
        %v849 = vld [vmem:[#allocation3 + $0x30] sm:$0xff]
        %v850 = vld [vmem:[#allocation3 + $0x38] sm:$0xff]
        %v851 = vld [vmem:[#allocation3 + $0x40] sm:$0xf]
        %v852 = vld [vmem:[#allocation3 + $0x48] sm:$0xf]
        %v853 = vld [vmem:[%s3] sm:$0xff]
        %855 = vset.pattern.permute.xlu0 0
        %856 = vperm.xlu0 %855, %v853
        %v857 = vpop.permute.xlu0 %856
        %vm859 = vcmask 293888
        %v861 = vsel %vm859, %v842, 0
        %vm863 = vcmask 1043456
        %v865 = vsel %vm863, %v851, 0
        %v868 = vsel %vm863, %v852, 0
        %870 = vmatprep.subr.mxu0 %v844
        %871 = vmatpush1.msra.mxu0 %v843
        %872 = vmatprep.subr.mxu0 %v846
        %873 = vmatpush1.msra.mxu0 %v845
        %874 = vmatprep.subr.mxu0 %v848
        %875 = vmatpush1.msra.mxu0 %v847
        %876 = vmatprep.subr.mxu0 %v850
        %877 = vmatpush1.msra.mxu0 %v849
        %878 = vmatprep.subr.mxu0 %v868
        %879 = vmatpush1.msra.mxu0 %v865
        %880 = vmatprep.subr.mxu0 0.0
        %881 = vmatpush1.msra.mxu0 0.0
        %882 = vmatprep.subr.mxu0 0.0
        %883 = vmatpush1.msra.mxu0 0.0
        %884 = vmatprep.subr.mxu0 0.0
        %885 = vmatpush1.msra.mxu0 0.0
        %886 = vmatprep.subr.mxu0 0.0
        %887 = vmatpush1.msra.mxu0 0.0
        %888 = vmatprep.subr.mxu0 0.0
        %889 = vmatpush1.msra.mxu0 0.0
        %890 = vmatprep.subr.mxu0 0.0
        %891 = vmatpush1.msra.mxu0 0.0
        %892 = vmatprep.subr.mxu0 0.0
        %893 = vmatpush1.msra.mxu0 0.0
        %894 = vmatprep.subr.mxu0 0.0
        %895 = vmatpush1.msra.mxu0 0.0
        %896 = vmatprep.subr.mxu0 0.0
        %897 = vmatpush1.msra.mxu0 0.0
        %898 = vmatprep.subr.mxu0 0.0
        %899 = vmatpush1.msra.mxu0 0.0
        %900 = vmatprep.subr.mxu0 0.0
        %901 = vmatpush1.msra.mxu0 0.0
        %902 = vmatprep.subr.mxu0 0.0
        %903 = vmatpush1.msra.mxu0 0.0
        %904 = vmatprep.subr.mxu0 0.0
        %905 = vmatpush1.msra.mxu0 0.0
        %906 = vmatprep.subr.mxu0 0.0
        %907 = vmatpush1.msra.mxu0 0.0
        %908 = vmatprep.subr.mxu0 0.0
        %909 = vmatpush1.msra.mxu0 0.0
        %910 = vmatprep.subr.mxu0 0.0
        %911 = vmatpush1.msra.mxu0 0.0
        %912 = vmatprep.subr.mxu0 0.0
        %913 = vmatpush1.msra.mxu0 0.0
        %914 = vmatprep.subr.mxu0 0.0
        %915 = vmatpush1.msra.mxu0 0.0
        %916 = vmatprep.subr.mxu0 0.0
        %917 = vmatpush1.msra.mxu0 0.0
        %918 = vmatprep.subr.mxu0 0.0
        %919 = vmatpush1.msra.mxu0 0.0
        %920 = vmatprep.subr.mxu0 0.0
        %921 = vmatpush1.msra.mxu0 0.0
        %922 = vmatprep.subr.mxu0 0.0
        %923 = vmatpush1.msra.mxu0 0.0
        %924 = vmatprep.subr.mxu0 0.0
        %925 = vmatpush1.msra.mxu0 0.0
        %926 = vmatprep.subr.mxu0 0.0
        %927 = vmatpush1.msra.mxu0 0.0
        %928 = vmatprep.subr.mxu0 0.0
        %929 = vmatpush1.msra.mxu0 0.0
        %930 = vmatprep.subr.mxu0 0.0
        %931 = vmatpush1.msra.mxu0 0.0
        %932 = vmatprep.subr.mxu0 0.0
        %933 = vmatpush1.msra.mxu0 0.0
        %934 = vmatprep.mubr.f32.mxu0 0.0
        %935 = vmatmul.mubr.f32.gmra.mrb[0].mxu0 %v861
        %v936 = vpop.f32.mrb[0].mxu0
        %v937 = vadd.f32 %v857, %v936
        %v938 = vpop.f32.mrb[0].mxu0
        %v939 = vadd.f32 %v857, %v938
        %940 = vdwg.mxu0
        %v941 = vmax.f32 %v937, 0.0
        %v942 = vmax.f32 %v939, 0.0
        %943 = vxpose.xlu0.b32.start [1/16] %v941, 128
        %944 = vxpose.xlu0.b32.cont [2/16] 0.0, 128
        %945 = vxpose.xlu0.b32.cont [3/16] 0.0, 128
        %946 = vxpose.xlu0.b32.cont [4/16] 0.0, 128
        %947 = vxpose.xlu0.b32.cont [5/16] 0.0, 128
        %948 = vxpose.xlu0.b32.cont [6/16] 0.0, 128
        %949 = vxpose.xlu0.b32.cont [7/16] 0.0, 128
        %950 = vxpose.xlu0.b32.cont [8/16] 0.0, 128
        %951 = vxpose.xlu0.b32.cont [9/16] 0.0, 128
        %952 = vxpose.xlu0.b32.cont [10/16] 0.0, 128
        %953 = vxpose.xlu0.b32.cont [11/16] 0.0, 128
        %954 = vxpose.xlu0.b32.cont [12/16] 0.0, 128
        %955 = vxpose.xlu0.b32.cont [13/16] 0.0, 128
        %956 = vxpose.xlu0.b32.cont [14/16] 0.0, 128
        %957 = vxpose.xlu0.b32.cont [15/16] 0.0, 128
        %958 = vxpose.xlu0.b32.end [16/16] 0.0, 128
        %v959 = vpop.trf.xlu0
        %v960 = vpop.trf.xlu0
        %v961 = vpop.trf.xlu0
        %v962 = vpop.trf.xlu0
        %v963 = vpop.trf.xlu0
        %v964 = vpop.trf.xlu0
        %v965 = vpop.trf.xlu0
        %v966 = vpop.trf.xlu0
        %v967 = vpop.trf.xlu0
        %v968 = vpop.trf.xlu0
        %v969 = vpop.trf.xlu0
        %v970 = vpop.trf.xlu0
        %v971 = vpop.trf.xlu0
        %v972 = vpop.trf.xlu0
        %v973 = vpop.trf.xlu0
        %v974 = vpop.trf.xlu0
        %975 = vxpose.xlu0.b32.start [1/16] %v942, 128
        %976 = vxpose.xlu0.b32.cont [2/16] 0.0, 128
        %977 = vxpose.xlu0.b32.cont [3/16] 0.0, 128
        %978 = vxpose.xlu0.b32.cont [4/16] 0.0, 128
        %979 = vxpose.xlu0.b32.cont [5/16] 0.0, 128
        %980 = vxpose.xlu0.b32.cont [6/16] 0.0, 128
        %981 = vxpose.xlu0.b32.cont [7/16] 0.0, 128
        %982 = vxpose.xlu0.b32.cont [8/16] 0.0, 128
        %983 = vxpose.xlu0.b32.cont [9/16] 0.0, 128
        %984 = vxpose.xlu0.b32.cont [10/16] 0.0, 128
        %985 = vxpose.xlu0.b32.cont [11/16] 0.0, 128
        %986 = vxpose.xlu0.b32.cont [12/16] 0.0, 128
        %987 = vxpose.xlu0.b32.cont [13/16] 0.0, 128
        %988 = vxpose.xlu0.b32.cont [14/16] 0.0, 128
        %989 = vxpose.xlu0.b32.cont [15/16] 0.0, 128
        %990 = vxpose.xlu0.b32.end [16/16] 0.0, 128
        %v991 = vpop.trf.xlu0
        %v992 = vpop.trf.xlu0
        %v993 = vpop.trf.xlu0
        %v994 = vpop.trf.xlu0
        %v995 = vpop.trf.xlu0
        %v996 = vpop.trf.xlu0
        %v997 = vpop.trf.xlu0
        %v998 = vpop.trf.xlu0
        %v999 = vpop.trf.xlu0
        %v1000 = vpop.trf.xlu0
        %v1001 = vpop.trf.xlu0
        %v1002 = vpop.trf.xlu0
        %v1003 = vpop.trf.xlu0
        %v1004 = vpop.trf.xlu0
        %v1005 = vpop.trf.xlu0
        %v1006 = vpop.trf.xlu0
        %v1007 = vld [vmem:[%s4] sm:$0xff]
        %vm1008 = vcmask 64512
        %v1010 = vsel %vm1008, %v959, 0
        %v1013 = vsel %vm1008, %v960, 0
        %v1016 = vsel %vm1008, %v961, 0
        %v1019 = vsel %vm1008, %v962, 0
        %v1022 = vsel %vm1008, %v963, 0
        %v1025 = vsel %vm1008, %v964, 0
        %v1028 = vsel %vm1008, %v965, 0
        %v1031 = vsel %vm1008, %v966, 0
        %v1034 = vsel %vm1008, %v967, 0
        %v1037 = vsel %vm1008, %v968, 0
        %v1040 = vsel %vm1008, %v969, 0
        %v1043 = vsel %vm1008, %v970, 0
        %v1046 = vsel %vm1008, %v971, 0
        %v1049 = vsel %vm1008, %v972, 0
        %v1052 = vsel %vm1008, %v973, 0
        %v1055 = vsel %vm1008, %v974, 0
        %v1058 = vsel %vm1008, %v991, 0
        %v1061 = vsel %vm1008, %v992, 0
        %v1064 = vsel %vm1008, %v993, 0
        %v1067 = vsel %vm1008, %v994, 0
        %v1070 = vsel %vm1008, %v995, 0
        %v1073 = vsel %vm1008, %v996, 0
        %v1076 = vsel %vm1008, %v997, 0
        %v1079 = vsel %vm1008, %v998, 0
        %v1082 = vsel %vm1008, %v999, 0
        %v1085 = vsel %vm1008, %v1000, 0
        %v1088 = vsel %vm1008, %v1001, 0
        %v1091 = vsel %vm1008, %v1002, 0
        %v1094 = vsel %vm1008, %v1003, 0
        %v1097 = vsel %vm1008, %v1004, 0
        %v1100 = vsel %vm1008, %v1005, 0
        %v1103 = vsel %vm1008, %v1006, 0
        %1105 = vmatprep.subr.mxu0 0.0
        %1106 = vmatpush1.msra.mxu0 %v1007
        %1107 = vmatprep.subr.mxu0 0.0
        %1108 = vmatpush1.msra.mxu0 0.0
        %1109 = vmatprep.subr.mxu0 0.0
        %1110 = vmatpush1.msra.mxu0 0.0
        %1111 = vmatprep.subr.mxu0 0.0
        %1112 = vmatpush1.msra.mxu0 0.0
        %1113 = vmatprep.subr.mxu0 0.0
        %1114 = vmatpush1.msra.mxu0 0.0
        %1115 = vmatprep.subr.mxu0 0.0
        %1116 = vmatpush1.msra.mxu0 0.0
        %1117 = vmatprep.subr.mxu0 0.0
        %1118 = vmatpush1.msra.mxu0 0.0
        %1119 = vmatprep.subr.mxu0 0.0
        %1120 = vmatpush1.msra.mxu0 0.0
        %1121 = vmatprep.subr.mxu0 0.0
        %1122 = vmatpush1.msra.mxu0 0.0
        %1123 = vmatprep.subr.mxu0 0.0
        %1124 = vmatpush1.msra.mxu0 0.0
        %1125 = vmatprep.subr.mxu0 0.0
        %1126 = vmatpush1.msra.mxu0 0.0
        %1127 = vmatprep.subr.mxu0 0.0
        %1128 = vmatpush1.msra.mxu0 0.0
        %1129 = vmatprep.subr.mxu0 0.0
        %1130 = vmatpush1.msra.mxu0 0.0
        %1131 = vmatprep.subr.mxu0 0.0
        %1132 = vmatpush1.msra.mxu0 0.0
        %1133 = vmatprep.subr.mxu0 0.0
        %1134 = vmatpush1.msra.mxu0 0.0
        %1135 = vmatprep.subr.mxu0 0.0
        %1136 = vmatpush1.msra.mxu0 0.0
        %1137 = vmatprep.subr.mxu0 0.0
        %1138 = vmatpush1.msra.mxu0 0.0
        %1139 = vmatprep.subr.mxu0 0.0
        %1140 = vmatpush1.msra.mxu0 0.0
        %1141 = vmatprep.subr.mxu0 0.0
        %1142 = vmatpush1.msra.mxu0 0.0
        %1143 = vmatprep.subr.mxu0 0.0
        %1144 = vmatpush1.msra.mxu0 0.0
        %1145 = vmatprep.subr.mxu0 0.0
        %1146 = vmatpush1.msra.mxu0 0.0
        %1147 = vmatprep.subr.mxu0 0.0
        %1148 = vmatpush1.msra.mxu0 0.0
        %1149 = vmatprep.subr.mxu0 0.0
        %1150 = vmatpush1.msra.mxu0 0.0
        %1151 = vmatprep.subr.mxu0 0.0
        %1152 = vmatpush1.msra.mxu0 0.0
        %1153 = vmatprep.subr.mxu0 0.0
        %1154 = vmatpush1.msra.mxu0 0.0
        %1155 = vmatprep.subr.mxu0 0.0
        %1156 = vmatpush1.msra.mxu0 0.0
        %1157 = vmatprep.subr.mxu0 0.0
        %1158 = vmatpush1.msra.mxu0 0.0
        %1159 = vmatprep.subr.mxu0 0.0
        %1160 = vmatpush1.msra.mxu0 0.0
        %1161 = vmatprep.subr.mxu0 0.0
        %1162 = vmatpush1.msra.mxu0 0.0
        %1163 = vmatprep.subr.mxu0 0.0
        %1164 = vmatpush1.msra.mxu0 0.0
        %1165 = vmatprep.subr.mxu0 0.0
        %1166 = vmatpush1.msra.mxu0 0.0
        %1167 = vmatprep.subr.mxu0 0.0
        %1168 = vmatpush1.msra.mxu0 0.0
        %1169 = vmatprep.mubr.f32.mxu0 0.0
        %1170 = vmatmul.mubr.f32.gmra.mrb[0].mxu0 %v1010
        %v1171 = vpop.f32.mrb[0].mxu0
        %v1172 = vadd.f32 0.0, %v1171
        %v1173 = vpop.f32.mrb[0].mxu0
        %1174 = vmatprep.mubr.f32.mxu0 0.0
        %1175 = vmatmul.mubr.f32.gmra.mrb[0].mxu0 %v1013
        %v1176 = vpop.f32.mrb[0].mxu0
        %v1177 = vadd.f32 0.0, %v1176
        %v1178 = vpop.f32.mrb[0].mxu0
        %1179 = vmatprep.mubr.f32.mxu0 0.0
        %1180 = vmatmul.mubr.f32.gmra.mrb[0].mxu0 %v1016
        %v1181 = vpop.f32.mrb[0].mxu0
        %v1182 = vadd.f32 0.0, %v1181
        %v1183 = vpop.f32.mrb[0].mxu0
        %1184 = vmatprep.mubr.f32.mxu0 0.0
        %1185 = vmatmul.mubr.f32.gmra.mrb[0].mxu0 %v1019
        %v1186 = vpop.f32.mrb[0].mxu0
        %v1187 = vadd.f32 0.0, %v1186
        %v1188 = vpop.f32.mrb[0].mxu0
        %1189 = vmatprep.mubr.f32.mxu0 0.0
        %1190 = vmatmul.mubr.f32.gmra.mrb[0].mxu0 %v1022
        %v1191 = vpop.f32.mrb[0].mxu0
        %v1192 = vadd.f32 0.0, %v1191
        %v1193 = vpop.f32.mrb[0].mxu0
        %1194 = vmatprep.mubr.f32.mxu0 0.0
        %1195 = vmatmul.mubr.f32.gmra.mrb[0].mxu0 %v1025
        %v1196 = vpop.f32.mrb[0].mxu0
        %v1197 = vadd.f32 0.0, %v1196
        %v1198 = vpop.f32.mrb[0].mxu0
        %1199 = vmatprep.mubr.f32.mxu0 0.0
        %1200 = vmatmul.mubr.f32.gmra.mrb[0].mxu0 %v1028
        %v1201 = vpop.f32.mrb[0].mxu0
        %v1202 = vadd.f32 0.0, %v1201
        %v1203 = vpop.f32.mrb[0].mxu0
        %1204 = vmatprep.mubr.f32.mxu0 0.0
        %1205 = vmatmul.mubr.f32.gmra.mrb[0].mxu0 %v1031
        %v1206 = vpop.f32.mrb[0].mxu0
        %v1207 = vadd.f32 0.0, %v1206
        %v1208 = vpop.f32.mrb[0].mxu0
        %1209 = vmatprep.mubr.f32.mxu0 0.0
        %1210 = vmatmul.mubr.f32.gmra.mrb[0].mxu0 %v1034
        %v1211 = vpop.f32.mrb[0].mxu0
        %v1212 = vadd.f32 0.0, %v1211
        %v1213 = vpop.f32.mrb[0].mxu0
        %1214 = vmatprep.mubr.f32.mxu0 0.0
        %1215 = vmatmul.mubr.f32.gmra.mrb[0].mxu0 %v1037
        %v1216 = vpop.f32.mrb[0].mxu0
        %v1217 = vadd.f32 0.0, %v1216
        %v1218 = vpop.f32.mrb[0].mxu0
        %1219 = vmatprep.mubr.f32.mxu0 0.0
        %1220 = vmatmul.mubr.f32.gmra.mrb[0].mxu0 %v1040
        %v1221 = vpop.f32.mrb[0].mxu0
        %v1222 = vadd.f32 0.0, %v1221
        %v1223 = vpop.f32.mrb[0].mxu0
        %1224 = vmatprep.mubr.f32.mxu0 0.0
        %1225 = vmatmul.mubr.f32.gmra.mrb[0].mxu0 %v1043
        %v1226 = vpop.f32.mrb[0].mxu0
        %v1227 = vadd.f32 0.0, %v1226
        %v1228 = vpop.f32.mrb[0].mxu0
        %1229 = vmatprep.mubr.f32.mxu0 0.0
        %1230 = vmatmul.mubr.f32.gmra.mrb[0].mxu0 %v1046
        %v1231 = vpop.f32.mrb[0].mxu0
        %v1232 = vadd.f32 0.0, %v1231
        %v1233 = vpop.f32.mrb[0].mxu0
        %1234 = vmatprep.mubr.f32.mxu0 0.0
        %1235 = vmatmul.mubr.f32.gmra.mrb[0].mxu0 %v1049
        %v1236 = vpop.f32.mrb[0].mxu0
        %v1237 = vadd.f32 0.0, %v1236
        %v1238 = vpop.f32.mrb[0].mxu0
        %1239 = vmatprep.mubr.f32.mxu0 0.0
        %1240 = vmatmul.mubr.f32.gmra.mrb[0].mxu0 %v1052
        %v1241 = vpop.f32.mrb[0].mxu0
        %v1242 = vadd.f32 0.0, %v1241
        %v1243 = vpop.f32.mrb[0].mxu0
        %1244 = vmatprep.mubr.f32.mxu0 0.0
        %1245 = vmatmul.mubr.f32.gmra.mrb[0].mxu0 %v1055
        %v1246 = vpop.f32.mrb[0].mxu0
        %v1247 = vadd.f32 0.0, %v1246
        %v1248 = vpop.f32.mrb[0].mxu0
        %1249 = vmatprep.mubr.f32.mxu0 0.0
        %1250 = vmatmul.mubr.f32.gmra.mrb[0].mxu0 %v1058
        %v1251 = vpop.f32.mrb[0].mxu0
        %v1252 = vadd.f32 0.0, %v1251
        %v1253 = vpop.f32.mrb[0].mxu0
        %1254 = vmatprep.mubr.f32.mxu0 0.0
        %1255 = vmatmul.mubr.f32.gmra.mrb[0].mxu0 %v1061
        %v1256 = vpop.f32.mrb[0].mxu0
        %v1257 = vadd.f32 0.0, %v1256
        %v1258 = vpop.f32.mrb[0].mxu0
        %1259 = vmatprep.mubr.f32.mxu0 0.0
        %1260 = vmatmul.mubr.f32.gmra.mrb[0].mxu0 %v1064
        %v1261 = vpop.f32.mrb[0].mxu0
        %v1262 = vadd.f32 0.0, %v1261
        %v1263 = vpop.f32.mrb[0].mxu0
        %1264 = vmatprep.mubr.f32.mxu0 0.0
        %1265 = vmatmul.mubr.f32.gmra.mrb[0].mxu0 %v1067
        %v1266 = vpop.f32.mrb[0].mxu0
        %v1267 = vadd.f32 0.0, %v1266
        %v1268 = vpop.f32.mrb[0].mxu0
        %1269 = vmatprep.mubr.f32.mxu0 0.0
        %1270 = vmatmul.mubr.f32.gmra.mrb[0].mxu0 %v1070
        %v1271 = vpop.f32.mrb[0].mxu0
        %v1272 = vadd.f32 0.0, %v1271
        %v1273 = vpop.f32.mrb[0].mxu0
        %1274 = vmatprep.mubr.f32.mxu0 0.0
        %1275 = vmatmul.mubr.f32.gmra.mrb[0].mxu0 %v1073
        %v1276 = vpop.f32.mrb[0].mxu0
        %v1277 = vadd.f32 0.0, %v1276
        %v1278 = vpop.f32.mrb[0].mxu0
        %1279 = vmatprep.mubr.f32.mxu0 0.0
        %1280 = vmatmul.mubr.f32.gmra.mrb[0].mxu0 %v1076
        %v1281 = vpop.f32.mrb[0].mxu0
        %v1282 = vadd.f32 0.0, %v1281
        %v1283 = vpop.f32.mrb[0].mxu0
        %1284 = vmatprep.mubr.f32.mxu0 0.0
        %1285 = vmatmul.mubr.f32.gmra.mrb[0].mxu0 %v1079
        %v1286 = vpop.f32.mrb[0].mxu0
        %v1287 = vadd.f32 0.0, %v1286
        %v1288 = vpop.f32.mrb[0].mxu0
        %1289 = vmatprep.mubr.f32.mxu0 0.0
        %1290 = vmatmul.mubr.f32.gmra.mrb[0].mxu0 %v1082
        %v1291 = vpop.f32.mrb[0].mxu0
        %v1292 = vadd.f32 0.0, %v1291
        %v1293 = vpop.f32.mrb[0].mxu0
        %1294 = vmatprep.mubr.f32.mxu0 0.0
        %1295 = vmatmul.mubr.f32.gmra.mrb[0].mxu0 %v1085
        %v1296 = vpop.f32.mrb[0].mxu0
        %v1297 = vadd.f32 0.0, %v1296
        %v1298 = vpop.f32.mrb[0].mxu0
        %1299 = vmatprep.mubr.f32.mxu0 0.0
        %1300 = vmatmul.mubr.f32.gmra.mrb[0].mxu0 %v1088
        %v1301 = vpop.f32.mrb[0].mxu0
        %v1302 = vadd.f32 0.0, %v1301
        %v1303 = vpop.f32.mrb[0].mxu0
        %1304 = vmatprep.mubr.f32.mxu0 0.0
        %1305 = vmatmul.mubr.f32.gmra.mrb[0].mxu0 %v1091
        %v1306 = vpop.f32.mrb[0].mxu0
        %v1307 = vadd.f32 0.0, %v1306
        %v1308 = vpop.f32.mrb[0].mxu0
        %1309 = vmatprep.mubr.f32.mxu0 0.0
        %1310 = vmatmul.mubr.f32.gmra.mrb[0].mxu0 %v1094
        %v1311 = vpop.f32.mrb[0].mxu0
        %v1312 = vadd.f32 0.0, %v1311
        %v1313 = vpop.f32.mrb[0].mxu0
        %1314 = vmatprep.mubr.f32.mxu0 0.0
        %1315 = vmatmul.mubr.f32.gmra.mrb[0].mxu0 %v1097
        %v1316 = vpop.f32.mrb[0].mxu0
        %v1317 = vadd.f32 0.0, %v1316
        %v1318 = vpop.f32.mrb[0].mxu0
        %1319 = vmatprep.mubr.f32.mxu0 0.0
        %1320 = vmatmul.mubr.f32.gmra.mrb[0].mxu0 %v1100
        %v1321 = vpop.f32.mrb[0].mxu0
        %v1322 = vadd.f32 0.0, %v1321
        %v1323 = vpop.f32.mrb[0].mxu0
        %1324 = vmatprep.mubr.f32.mxu0 0.0
        %1325 = vmatmul.mubr.f32.gmra.mrb[0].mxu0 %v1103
        %v1326 = vpop.f32.mrb[0].mxu0
        %v1327 = vadd.f32 0.0, %v1326
        %v1328 = vpop.f32.mrb[0].mxu0
        %1329 = vdwg.mxu0
        %v1330 = vadd.f32 %v1172, %v1177
        %v1331 = vadd.f32 %v1330, %v1182
        %v1332 = vadd.f32 %v1331, %v1187
        %v1333 = vadd.f32 %v1332, %v1192
        %v1334 = vadd.f32 %v1333, %v1197
        %v1335 = vadd.f32 %v1334, %v1202
        %v1336 = vadd.f32 %v1335, %v1207
        %v1337 = vadd.f32 %v1336, %v1212
        %v1338 = vadd.f32 %v1337, %v1217
        %v1339 = vadd.f32 %v1338, %v1222
        %v1340 = vadd.f32 %v1339, %v1227
        %v1341 = vadd.f32 %v1340, %v1232
        %v1342 = vadd.f32 %v1341, %v1237
        %v1343 = vadd.f32 %v1342, %v1242
        %v1344 = vadd.f32 %v1343, %v1247
        %v1345 = vadd.f32 %v1344, %v1252
        %v1346 = vadd.f32 %v1345, %v1257
        %v1347 = vadd.f32 %v1346, %v1262
        %v1348 = vadd.f32 %v1347, %v1267
        %v1349 = vadd.f32 %v1348, %v1272
        %v1350 = vadd.f32 %v1349, %v1277
        %v1351 = vadd.f32 %v1350, %v1282
        %v1352 = vadd.f32 %v1351, %v1287
        %v1353 = vadd.f32 %v1352, %v1292
        %v1354 = vadd.f32 %v1353, %v1297
        %v1355 = vadd.f32 %v1354, %v1302
        %v1356 = vadd.f32 %v1355, %v1307
        %v1357 = vadd.f32 %v1356, %v1312
        %v1358 = vadd.f32 %v1357, %v1317
        %v1359 = vadd.f32 %v1358, %v1322
        %v1360 = vadd.f32 %v1359, %v1327
        %v1361 = vrot.slane %v1360, 4
        %v1362 = vadd.f32 %v1360, %v1361
        %v1363 = vrot.slane %v1362, 2
        %v1364 = vadd.f32 %v1362, %v1363
        %v1365 = vrot.slane %v1364, 1
        %v1366 = vadd.f32 %v1364, %v1365
        %v1367 = vmul.f32 %v1366, 0.00390625
        %v1368 = vld [vmem:[%s5] sm:$0x1]
        %v1369 = vadd.f32 %v1367, %v1368
        %1370 = vst [vmem:[%s268] sm:$0x1] %v1369
        %s1371 = sand.u32 %s162, 1
        %s1372 = scalar_lea.sflag [#allocation6], %s1371
        %s1373 = sand.u32 %s162, 1
        %s1374 = scalar_lea.vmem [#allocation7], %s1373
        // Predicated region
        $region49: #{localization_trainer_forward.1} parent=43 // pred_check
          %p1375 = pneg %p172
        $region50: #{localization_trainer_forward.1} parent=43 // pred_check_branch
          %1377 = sbr.rel (%p1375) target = $region52
        $region51: #{localization_trainer_forward.1} parent=43 // pred_region
          %s1379 = ssub.s32 16, 16
          %1380 = vsyncadd %s1372, %s1379
          %s1381 = smul.addr %s23, 16
          %s1382 = scalar_lea.hbm %s6, %s1381
          %s1384 = sshll.u32 %s1374, 4
          %s1385 = int_to_ptr.vmem [resolvable:$true] %s1384
          %1387 = dma.vmem_to_hbm [thread:$0]  %s1385, 16, %s1382, %s1372
        $region52: #{localization_trainer_forward.1} parent=43 // pred_fallthru
          _
      $region44: #{localization_trainer_forward.1} parent=5 // pred_fallthru
        _
      %p1388 = scmp.le.s32.totalorder 2, %s18
      // Predicated region
      $region53: #{localization_trainer_forward.1} parent=5 // pred_check
        %p1389 = pneg %p1388
      $region54: #{localization_trainer_forward.1} parent=5 // pred_check_branch
        %1391 = sbr.rel (%p1389) target = $region56
      $region55: #{localization_trainer_forward.1} parent=5 // pred_region
        %s1392 = ssub.s32 %s18, 2
        // Predicated region
        $region57: #{localization_trainer_forward.1} parent=55 // pred_check
          %p1393 = pneg %p178
        $region58: #{localization_trainer_forward.1} parent=55 // pred_check_branch
          %1395 = sbr.rel (%p1393) target = $region60
        $region59: #{localization_trainer_forward.1} parent=55 // pred_region
          %s1396 = sand.u32 %s163, 1
          %s1397 = scalar_lea.sflag [#allocation6], %s1396
          %s1398 = sand.u32 %s163, 1
          %s1399 = scalar_lea.vmem [#allocation7], %s1398
          %1400 = dma.done %s1397, 16
        $region60: #{localization_trainer_forward.1} parent=55 // pred_fallthru
          _
      $region56: #{localization_trainer_forward.1} parent=5 // pred_fallthru
        _
    $region6: #{localization_trainer_forward.1} parent=1 // loop_footer
      %s22 = sadd.s32 1, %s18
    $region7: #{localization_trainer_forward.1} parent=1 // loop_footer_branch
      %17 = sbr.rel target = $region3
    $region8: #{localization_trainer_forward.1} parent=1 // loop_exit
      _
    %1401 = vsyncpa [#allocation5], 1
    %s1402 = scalar_lea.sflag [#allocation5], 1
    %1403 = vsyncpa %s1402, 1
    %1404 = vsyncpa [#allocation6], 1
    %s1405 = scalar_lea.sflag [#allocation6], 1
    %1406 = vsyncpa %s1405, 1

</llo_original>
